<compile_context>
chip_gen: v7x
topology: tpu7x:2x2x1
jax: 0.10.0
libtpu: 0.0.40
codegen_flags: <defaults>
</compile_context>

<pallas_src>
import functools
import math

import jax
import jax.numpy as jnp
import numpy as np
from jax.experimental import pallas as pl
from jax.experimental.pallas import tpu as pltpu


def _mhsa_kernel(x_ref, wqv_ref, bqv_ref, wk_ref, bk_ref, bias_ref,
                 h_ref, *rest, n_heads, q_tile, with_scores, compute_dtype):
    """Grid = (batch, query_tile).

    x_ref    : (1, S, D)    full (padded) sequence, compute dtype
    wqv_ref  : (D, 2D)      [Wq^T * scale | Wv^T], compute dtype
    bqv_ref  : (1, 2D)      [bq * scale | bv], f32
    wk_ref   : (D, D)       Wk (PyTorch orientation), compute dtype
    bk_ref   : (D, 1)       bk as a column, f32
    bias_ref : (1, 1, S)    additive mask bias -10000*(1-mask), f32
    h_ref    : (1, TQ, D)   output tile, f32
    scores_ref (opt) : (1, H, TQ, S) f32
    scratch  : q_sc (H,S,dh), kt_sc (H,dh,S), v_sc (H,S,dh)  (compute dtype)
    """
    if with_scores:
        scores_ref = rest[0]
        q_sc, kt_sc, v_sc = rest[1:]
    else:
        scores_ref = None
        q_sc, kt_sc, v_sc = rest

    S = x_ref.shape[1]
    D = x_ref.shape[2]
    dh = D // n_heads
    qi = pl.program_id(1)
    cdt = compute_dtype

    # ---- QKV projection, once per batch element (q-tile 0 only). ----------
    # The q-tile axis is sequential ("arbitrary"), so the head-major scratch
    # persists across the remaining q-tiles of this batch element.
    @pl.when(qi == 0)
    def _project():
        x = x_ref[0]                                               # (S, D)
        # Q and V fused: (S, D) @ (D, 2D); scale already folded into Wq/bq.
        qv = (jnp.dot(x, wqv_ref[...],
                      preferred_element_type=jnp.float32)
              + bqv_ref[...])                                      # (S, 2D) f32
        # K produced directly TRANSPOSED: kt[d, s] = sum_c Wk[d, c] * x[s, c]
        # (i.e. Wk @ x^T), so no per-tile relayout is needed later.
        kt = (jnp.einsum('dc,sc->ds', wk_ref[...], x,
                         preferred_element_type=jnp.float32)
              + bk_ref[...])                                       # (D, S) f32
        for hd in range(n_heads):
            lo = hd * dh
            q_sc[hd] = qv[:, lo:lo + dh].astype(cdt)               # (S, dh)
            v_sc[hd] = qv[:, D + lo:D + lo + dh].astype(cdt)       # (S, dh)
            kt_sc[hd] = kt[lo:lo + dh, :].astype(cdt)              # (dh, S)

    # ---- Attention for this query tile, all heads batched. ----------------
    if q_tile == S:
        qh = q_sc[...]                                             # (H, S, dh)
    else:
        row0 = pl.multiple_of(qi * q_tile, q_tile)
        qh = q_sc[:, pl.ds(row0, q_tile), :]                       # (H, TQ, dh)

    s = jnp.einsum('hqd,hdk->hqk', qh, kt_sc[...],
                   preferred_element_type=jnp.float32)             # (H, TQ, S)
    s = s + bias_ref[0]                                            # mask bias

    # Numerically-stable softmax over the key axis (f32 element-wise math).
    s = s - jnp.max(s, axis=-1, keepdims=True)
    e = jnp.exp(s)
    denom = jnp.sum(e, axis=-1, keepdims=True)
    p = e * pl.reciprocal(denom, approx=True)                      # (H, TQ, S)

    if with_scores:
        scores_ref[0] = p                                          # dense store

    o = jnp.einsum('hqk,hkd->hqd', p.astype(cdt), v_sc[...],
                   preferred_element_type=jnp.float32)             # (H, TQ, dh)

    # Merge heads directly into the VMEM output block; the HBM write-back is
    # one lane-dense (TQ, D) block per tile (handled by the pipeline).
    for hd in range(n_heads):
        h_ref[0, :, hd * dh:(hd + 1) * dh] = o[hd]


def _vmem_bytes_estimate(S, D, H, dh, q_tile, cbytes, with_scores):
    """Rough VMEM working-set estimate (lane/sublane padding included)."""
    def rnd(n, m):
        return ((n + m - 1) // m) * m
    lane = lambda n: rnd(n, 128)
    sub_c = 16 if cbytes == 2 else 8
    est = 0
    # double-buffered input blocks
    est += 2 * rnd(S, sub_c) * lane(D) * cbytes           # x
    est += 2 * rnd(D, sub_c) * lane(2 * D) * cbytes       # wqv
    est += 2 * rnd(D, sub_c) * lane(D) * cbytes           # wk
    est += 2 * 8 * lane(2 * D) * 4                        # bqv
    est += 2 * rnd(D, 8) * 128 * 4                        # bk
    est += 2 * 8 * lane(S) * 4                            # mask bias
    # double-buffered output blocks
    est += 2 * rnd(q_tile, 8) * lane(D) * 4               # h tile
    if with_scores:
        est += 2 * H * rnd(q_tile, 8) * lane(S) * 4       # scores tile
    # persistent scratch (single copies)
    est += 2 * H * rnd(S, sub_c) * lane(dh) * cbytes      # q_sc + v_sc
    est += H * rnd(dh, sub_c) * lane(S) * cbytes          # kt_sc
    return est


def multi_headed_self_attention(x, mask, wq, bq, wk, bk, wv, bv, n_heads,
                                return_scores=False, q_tile=None,
                                compute_dtype=jnp.bfloat16):
    """x: (B, S, D) f32, mask: (B, S) (1 = keep, 0 = masked).

    Returns h: (B, S, D) f32, and scores: (B, n_heads, S, S) f32 as well when
    return_scores=True (matching the PyTorch module's eval-mode forward).
    """
    B, S, D = x.shape
    assert D % n_heads == 0
    dh = D // n_heads
    scale = 1.0 / math.sqrt(dh)
    cbytes = jnp.dtype(compute_dtype).itemsize

    # ---- q-tile selection + sequence padding (keeps scores block O(TQ*S)). --
    if q_tile is None:
        if S % 128 == 0:
            q_tile = 128
        elif S <= 256:
            q_tile = S
        else:
            q_tile = 128          # ragged long S: pad up to a tile multiple
    S_pad = pl.cdiv(S, q_tile) * q_tile
    assert q_tile == S_pad or q_tile % 8 == 0

    # Shrink q_tile if the estimated working set exceeds a v7x-friendly budget.
    budget = 48 * 1024 * 1024
    est = _vmem_bytes_estimate(S_pad, D, n_heads, dh, q_tile, cbytes,
                               return_scores)
    while (est > budget and q_tile > 64 and q_tile % 16 == 0
           and S_pad % (q_tile // 2) == 0):
        q_tile //= 2
        est = _vmem_bytes_estimate(S_pad, D, n_heads, dh, q_tile, cbytes,
                                   return_scores)
    nq = S_pad // q_tile
    vmem_limit = int(min(max(est + (8 << 20), 32 << 20), 96 << 20))

    if S_pad != S:
        x = jnp.pad(x, ((0, 0), (0, S_pad - S), (0, 0)))
        mask = jnp.pad(mask.astype(jnp.float32), ((0, 0), (0, S_pad - S)))

    # ---- Wrapper-side prep: fold scale into Q, precompute mask bias. --------
    # nn.Linear computes x @ W.T + b.
    wqv = jnp.concatenate([wq.T * scale, wv.T], axis=1).astype(compute_dtype)
    bqv = jnp.concatenate([bq * scale, bv]).reshape(1, 2 * D).astype(jnp.float32)
    wk_in = wk.astype(compute_dtype)                     # (D, D), as-is
    bk_in = bk.reshape(D, 1).astype(jnp.float32)
    bias = (-10000.0 * (1.0 - mask.astype(jnp.float32))).reshape(B, 1, S_pad)
    x_in = x.astype(compute_dtype)

    kernel = functools.partial(_mhsa_kernel, n_heads=n_heads, q_tile=q_tile,
                               with_scores=return_scores,
                               compute_dtype=compute_dtype)

    h_shape = jax.ShapeDtypeStruct((B, S_pad, D), jnp.float32)
    h_spec = pl.BlockSpec((1, q_tile, D), lambda b, qi: (b, qi, 0))
    if return_scores:
        out_shape = (h_shape,
                     jax.ShapeDtypeStruct((B, n_heads, S_pad, S_pad),
                                          jnp.float32))
        out_specs = [h_spec,
                     pl.BlockSpec((1, n_heads, q_tile, S_pad),
                                  lambda b, qi: (b, 0, qi, 0))]
    else:
        out_shape = h_shape
        out_specs = h_spec

    outs = pl.pallas_call(
        kernel,
        out_shape=out_shape,
        grid_spec=pltpu.PrefetchScalarGridSpec(
            num_scalar_prefetch=0,
            grid=(B, nq),
            in_specs=[
                pl.BlockSpec((1, S_pad, D), lambda b, qi: (b, 0, 0)),   # x
                pl.BlockSpec((D, 2 * D), lambda b, qi: (0, 0)),         # Wqv
                pl.BlockSpec((1, 2 * D), lambda b, qi: (0, 0)),         # bqv
                pl.BlockSpec((D, D), lambda b, qi: (0, 0)),             # Wk
                pl.BlockSpec((D, 1), lambda b, qi: (0, 0)),             # bk
                pl.BlockSpec((1, 1, S_pad), lambda b, qi: (b, 0, 0)),   # bias
            ],
            out_specs=out_specs,
            scratch_shapes=[
                pltpu.VMEM((n_heads, S_pad, dh), compute_dtype),  # Q head-major
                pltpu.VMEM((n_heads, dh, S_pad), compute_dtype),  # K^T head-major
                pltpu.VMEM((n_heads, S_pad, dh), compute_dtype),  # V head-major
            ]),
        # The q-tile axis must stay "arbitrary": the q-tile 0 projection fills
        # the persistent Q/K^T/V scratch consumed by the later q-tiles.
        compiler_params=pltpu.CompilerParams(
            dimension_semantics=("parallel", "arbitrary"),
            vmem_limit_bytes=vmem_limit),
    )(x_in, wqv, bqv, wk_in, bk_in, bias)

    if return_scores:
        h, scores = outs
        if S_pad != S:
            h = h[:, :S, :]
            scores = scores[:, :, :S, :S]
        return h, scores
    h = outs
    if S_pad != S:
        h = h[:, :S, :]
    return h


def _reference(x, mask, wq, bq, wk, bk, wv, bv, n_heads):
    """Pure-JAX reference mirroring the PyTorch forward (eval dropout)."""
    B, S, D = x.shape
    dh = D // n_heads
    q = x @ wq.T + bq
    k = x @ wk.T + bk
    v = x @ wv.T + bv

    def split(t):
        return t.reshape(B, S, n_heads, dh).transpose(0, 2, 1, 3)

    q, k, v = split(q), split(k), split(v)
    scores = (q @ k.transpose(0, 1, 3, 2)) / np.sqrt(dh)
    m = mask[:, None, None, :].astype(jnp.float32)
    scores = scores - 10000.0 * (1.0 - m)
    scores = jax.nn.softmax(scores, axis=-1)
    h = (scores @ v).transpose(0, 2, 1, 3).reshape(B, S, D)
    return h, scores


def _run_case(B, S, D, H, q_tile=None, compute_dtype=jnp.bfloat16,
              tol=2e-2, check_no_scores=False):
    key = jax.random.PRNGKey(0)
    kx, kq, kbq, kk, kbk, kv, kbv = jax.random.split(key, 7)

    x = jax.random.normal(kx, (B, S, D), dtype=jnp.float32)
    bound = 1.0 / math.sqrt(D)   # nn.Linear default init range
    wq = jax.random.uniform(kq, (D, D), jnp.float32, -bound, bound)
    bq = jax.random.uniform(kbq, (D,), jnp.float32, -bound, bound)
    wk = jax.random.uniform(kk, (D, D), jnp.float32, -bound, bound)
    bk = jax.random.uniform(kbk, (D,), jnp.float32, -bound, bound)
    wv = jax.random.uniform(kv, (D, D), jnp.float32, -bound, bound)
    bv = jax.random.uniform(kbv, (D,), jnp.float32, -bound, bound)

    # mask: 1 = attend, 0 = masked (last two positions of batch 1 masked)
    mask = jnp.ones((B, S), dtype=jnp.float32).at[1, -2:].set(0.0)

    h, scores = multi_headed_self_attention(
        x, mask, wq, bq, wk, bk, wv, bv, n_heads=H,
        return_scores=True, q_tile=q_tile, compute_dtype=compute_dtype)
    jax.block_until_ready((h, scores))

    h_ref, scores_ref = _reference(x, mask, wq, bq, wk, bk, wv, bv, H)
    # Tolerance accounts for bf16 MXU operands (default) and the approximate
    # EUP reciprocal used for the softmax denominator.
    np.testing.assert_allclose(np.asarray(h), np.asarray(h_ref),
                               rtol=tol, atol=tol)
    np.testing.assert_allclose(np.asarray(scores), np.asarray(scores_ref),
                               rtol=tol, atol=tol)

    if check_no_scores:
        h_only = multi_headed_self_attention(
            x, mask, wq, bq, wk, bk, wv, bv, n_heads=H,
            return_scores=False, q_tile=q_tile, compute_dtype=compute_dtype)
        jax.block_until_ready(h_only)
        np.testing.assert_allclose(np.asarray(h_only), np.asarray(h_ref),
                                   rtol=tol, atol=tol)


if __name__ == "__main__":
    # Small shape consistent with the module: batch=2, seq=8, hidden=32, heads=4.
    _run_case(2, 8, 32, 4, check_no_scores=True)
    # Same shape with f32 compute (tighter tolerance) to validate structure.
    _run_case(2, 8, 32, 4, compute_dtype=jnp.float32, tol=5e-3)
    # Query-tile grid axis / persistent-scratch reuse path (TQ=128, 2 tiles).
    _run_case(2, 256, 32, 4, q_tile=128)
    # Ragged long sequence: padded to a tile multiple (S=300 -> 384, TQ=128).
    _run_case(2, 300, 32, 4)
    print("KERNEL_OK")
</pallas_src>

<mosaic_0001>
module attributes {stable_mosaic.version = 11 : i64} {
  func.func @_mhsa_kernel(%arg0: i32, %arg1: i32, %arg2: memref<1x8x32xbf16, #tpu.memory_space<vmem>>, %arg3: memref<32x64xbf16, #tpu.memory_space<vmem>>, %arg4: memref<1x64xf32, #tpu.memory_space<vmem>>, %arg5: memref<32x32xbf16, #tpu.memory_space<vmem>>, %arg6: memref<32x1xf32, #tpu.memory_space<vmem>>, %arg7: memref<1x1x8xf32, #tpu.memory_space<vmem>>, %arg8: memref<1x8x32xf32, #tpu.memory_space<vmem>>, %arg9: memref<1x4x8x8xf32, #tpu.memory_space<vmem>>, %arg10: memref<4x8x8xbf16, #tpu.memory_space<vmem>>, %arg11: memref<4x8x8xbf16, #tpu.memory_space<vmem>>, %arg12: memref<4x8x8xbf16, #tpu.memory_space<vmem>>) attributes {dimension_semantics = [#tpu.dimension_semantics<parallel>, #tpu.dimension_semantics<arbitrary>], iteration_bounds = array<i64: 2, 1>, scalar_prefetch = 0 : i64, scratch_operands = 3 : i64, tpu.core_type = #tpu.core_type<tc>, window_params = [{transform_indices = @transform_0, window_bounds = array<i64: 1, 8, 32>}, {pipeline_mode = #tpu.pipeline_mode<synchronous>, transform_indices = @transform_1, window_bounds = array<i64: 32, 64>}, {pipeline_mode = #tpu.pipeline_mode<synchronous>, transform_indices = @transform_2, window_bounds = array<i64: 1, 64>}, {pipeline_mode = #tpu.pipeline_mode<synchronous>, transform_indices = @transform_3, window_bounds = array<i64: 32, 32>}, {pipeline_mode = #tpu.pipeline_mode<synchronous>, transform_indices = @transform_4, window_bounds = array<i64: 32, 1>}, {transform_indices = @transform_5, window_bounds = array<i64: 1, 1, 8>}, {transform_indices = @transform_6, window_bounds = array<i64: 1, 8, 32>}, {transform_indices = @transform_7, window_bounds = array<i64: 1, 4, 8, 8>}]} {
    %c0_i32 = arith.constant 0 : i32
    %0 = arith.cmpi eq, %arg1, %c0_i32 : i32
    %1 = arith.extui %0 : i1 to i32
    %c0_i32_0 = arith.constant 0 : i32
    %2 = arith.cmpi ne, %1, %c0_i32_0 : i32
    scf.if %2 {
      %c0_28 = arith.constant 0 : index
      %c0_29 = arith.constant 0 : index
      %c0_30 = arith.constant 0 : index
      %47 = vector.load %arg2[%c0_28, %c0_29, %c0_30] : memref<1x8x32xbf16, #tpu.memory_space<vmem>>, vector<1x8x32xbf16>
      %48 = vector.shape_cast %47 : vector<1x8x32xbf16> to vector<8x32xbf16>
      %c0_31 = arith.constant 0 : index
      %c0_32 = arith.constant 0 : index
      %49 = vector.load %arg3[%c0_31, %c0_32] : memref<32x64xbf16, #tpu.memory_space<vmem>>, vector<32x64xbf16>
      %cst_33 = arith.constant dense<0.000000e+00> : vector<8x64xf32>
      %50 = tpu.matmul %48, %49, %cst_33 {dimension_numbers = #tpu.dot_dimension_numbers<[1], [0], [0], [1], [0, 0, 1, 1], [], []>} : vector<8x32xbf16>, vector<32x64xbf16>, vector<8x64xf32> -> vector<8x64xf32>
      %c0_34 = arith.constant 0 : index
      %c0_35 = arith.constant 0 : index
      %51 = vector.load %arg4[%c0_34, %c0_35] : memref<1x64xf32, #tpu.memory_space<vmem>>, vector<1x64xf32>
      %52 = vector.broadcast %51 : vector<1x64xf32> to vector<8x64xf32>
      %53 = arith.addf %50, %52 : vector<8x64xf32>
      %c0_36 = arith.constant 0 : index
      %c0_37 = arith.constant 0 : index
      %54 = vector.load %arg5[%c0_36, %c0_37] : memref<32x32xbf16, #tpu.memory_space<vmem>>, vector<32x32xbf16>
      "tpu.trace_start"() <{level = 10 : i32, message = "dc,sc->ds"}> : () -> ()
      %cst_38 = arith.constant dense<0.000000e+00> : vector<32x8xf32>
      %55 = tpu.matmul %54, %48, %cst_38 {dimension_numbers = #tpu.dot_dimension_numbers<[1], [1], [0], [0], [0, 0, 1, 0], [], []>} : vector<32x32xbf16>, vector<8x32xbf16>, vector<32x8xf32> -> vector<32x8xf32>
      "tpu.trace_stop"() : () -> ()
      %c0_39 = arith.constant 0 : index
      %c0_40 = arith.constant 0 : index
      %56 = vector.load %arg6[%c0_39, %c0_40] : memref<32x1xf32, #tpu.memory_space<vmem>>, vector<32x1xf32>
      %57 = vector.broadcast %56 : vector<32x1xf32> to vector<32x8xf32>
      %58 = arith.addf %55, %57 : vector<32x8xf32>
      %59 = vector.extract_strided_slice %53 {offsets = [0, 0], sizes = [8, 8], strides = [1, 1]} : vector<8x64xf32> to vector<8x8xf32>
      %60 = arith.truncf %59 : vector<8x8xf32> to vector<8x8xbf16>
      %c0_41 = arith.constant 0 : index
      %c0_42 = arith.constant 0 : index
      %c0_43 = arith.constant 0 : index
      %61 = vector.load %arg10[%c0_41, %c0_42, %c0_43] : memref<4x8x8xbf16, #tpu.memory_space<vmem>>, vector<1x8x8xbf16>
      %62 = vector.shape_cast %61 : vector<1x8x8xbf16> to vector<8x8xbf16>
      %63 = vector.shape_cast %60 : vector<8x8xbf16> to vector<1x8x8xbf16>
      tpu.vector_store %arg10[%c0_41, %c0_42, %c0_43], %63 {strides = array<i32>} : memref<4x8x8xbf16, #tpu.memory_space<vmem>>, vector<1x8x8xbf16>,
      %64 = vector.extract_strided_slice %53 {offsets = [0, 32], sizes = [8, 8], strides = [1, 1]} : vector<8x64xf32> to vector<8x8xf32>
      %65 = arith.truncf %64 : vector<8x8xf32> to vector<8x8xbf16>
      %c0_44 = arith.constant 0 : index
      %c0_45 = arith.constant 0 : index
      %c0_46 = arith.constant 0 : index
      %66 = vector.load %arg12[%c0_44, %c0_45, %c0_46] : memref<4x8x8xbf16, #tpu.memory_space<vmem>>, vector<1x8x8xbf16>
      %67 = vector.shape_cast %66 : vector<1x8x8xbf16> to vector<8x8xbf16>
      %68 = vector.shape_cast %65 : vector<8x8xbf16> to vector<1x8x8xbf16>
      tpu.vector_store %arg12[%c0_44, %c0_45, %c0_46], %68 {strides = array<i32>} : memref<4x8x8xbf16, #tpu.memory_space<vmem>>, vector<1x8x8xbf16>,
      %69 = vector.extract_strided_slice %58 {offsets = [0, 0], sizes = [8, 8], strides = [1, 1]} : vector<32x8xf32> to vector<8x8xf32>
      %70 = arith.truncf %69 : vector<8x8xf32> to vector<8x8xbf16>
      %c0_47 = arith.constant 0 : index
      %c0_48 = arith.constant 0 : index
      %c0_49 = arith.constant 0 : index
      %71 = vector.load %arg11[%c0_47, %c0_48, %c0_49] : memref<4x8x8xbf16, #tpu.memory_space<vmem>>, vector<1x8x8xbf16>
      %72 = vector.shape_cast %71 : vector<1x8x8xbf16> to vector<8x8xbf16>
      %73 = vector.shape_cast %70 : vector<8x8xbf16> to vector<1x8x8xbf16>
      tpu.vector_store %arg11[%c0_47, %c0_48, %c0_49], %73 {strides = array<i32>} : memref<4x8x8xbf16, #tpu.memory_space<vmem>>, vector<1x8x8xbf16>,
      %74 = vector.extract_strided_slice %53 {offsets = [0, 8], sizes = [8, 8], strides = [1, 1]} : vector<8x64xf32> to vector<8x8xf32>
      %75 = arith.truncf %74 : vector<8x8xf32> to vector<8x8xbf16>
      %c1 = arith.constant 1 : index
      %c0_50 = arith.constant 0 : index
      %c0_51 = arith.constant 0 : index
      %76 = vector.load %arg10[%c1, %c0_50, %c0_51] : memref<4x8x8xbf16, #tpu.memory_space<vmem>>, vector<1x8x8xbf16>
      %77 = vector.shape_cast %76 : vector<1x8x8xbf16> to vector<8x8xbf16>
      %78 = vector.shape_cast %75 : vector<8x8xbf16> to vector<1x8x8xbf16>
      tpu.vector_store %arg10[%c1, %c0_50, %c0_51], %78 {strides = array<i32>} : memref<4x8x8xbf16, #tpu.memory_space<vmem>>, vector<1x8x8xbf16>,
      %79 = vector.extract_strided_slice %53 {offsets = [0, 40], sizes = [8, 8], strides = [1, 1]} : vector<8x64xf32> to vector<8x8xf32>
      %80 = arith.truncf %79 : vector<8x8xf32> to vector<8x8xbf16>
      %c1_52 = arith.constant 1 : index
      %c0_53 = arith.constant 0 : index
      %c0_54 = arith.constant 0 : index
      %81 = vector.load %arg12[%c1_52, %c0_53, %c0_54] : memref<4x8x8xbf16, #tpu.memory_space<vmem>>, vector<1x8x8xbf16>
      %82 = vector.shape_cast %81 : vector<1x8x8xbf16> to vector<8x8xbf16>
      %83 = vector.shape_cast %80 : vector<8x8xbf16> to vector<1x8x8xbf16>
      tpu.vector_store %arg12[%c1_52, %c0_53, %c0_54], %83 {strides = array<i32>} : memref<4x8x8xbf16, #tpu.memory_space<vmem>>, vector<1x8x8xbf16>,
      %84 = vector.extract_strided_slice %58 {offsets = [8, 0], sizes = [8, 8], strides = [1, 1]} : vector<32x8xf32> to vector<8x8xf32>
      %85 = arith.truncf %84 : vector<8x8xf32> to vector<8x8xbf16>
      %c1_55 = arith.constant 1 : index
      %c0_56 = arith.constant 0 : index
      %c0_57 = arith.constant 0 : index
      %86 = vector.load %arg11[%c1_55, %c0_56, %c0_57] : memref<4x8x8xbf16, #tpu.memory_space<vmem>>, vector<1x8x8xbf16>
      %87 = vector.shape_cast %86 : vector<1x8x8xbf16> to vector<8x8xbf16>
      %88 = vector.shape_cast %85 : vector<8x8xbf16> to vector<1x8x8xbf16>
      tpu.vector_store %arg11[%c1_55, %c0_56, %c0_57], %88 {strides = array<i32>} : memref<4x8x8xbf16, #tpu.memory_space<vmem>>, vector<1x8x8xbf16>,
      %89 = vector.extract_strided_slice %53 {offsets = [0, 16], sizes = [8, 8], strides = [1, 1]} : vector<8x64xf32> to vector<8x8xf32>
      %90 = arith.truncf %89 : vector<8x8xf32> to vector<8x8xbf16>
      %c2 = arith.constant 2 : index
      %c0_58 = arith.constant 0 : index
      %c0_59 = arith.constant 0 : index
      %91 = vector.load %arg10[%c2, %c0_58, %c0_59] : memref<4x8x8xbf16, #tpu.memory_space<vmem>>, vector<1x8x8xbf16>
      %92 = vector.shape_cast %91 : vector<1x8x8xbf16> to vector<8x8xbf16>
      %93 = vector.shape_cast %90 : vector<8x8xbf16> to vector<1x8x8xbf16>
      tpu.vector_store %arg10[%c2, %c0_58, %c0_59], %93 {strides = array<i32>} : memref<4x8x8xbf16, #tpu.memory_space<vmem>>, vector<1x8x8xbf16>,
      %94 = vector.extract_strided_slice %53 {offsets = [0, 48], sizes = [8, 8], strides = [1, 1]} : vector<8x64xf32> to vector<8x8xf32>
      %95 = arith.truncf %94 : vector<8x8xf32> to vector<8x8xbf16>
      %c2_60 = arith.constant 2 : index
      %c0_61 = arith.constant 0 : index
      %c0_62 = arith.constant 0 : index
      %96 = vector.load %arg12[%c2_60, %c0_61, %c0_62] : memref<4x8x8xbf16, #tpu.memory_space<vmem>>, vector<1x8x8xbf16>
      %97 = vector.shape_cast %96 : vector<1x8x8xbf16> to vector<8x8xbf16>
      %98 = vector.shape_cast %95 : vector<8x8xbf16> to vector<1x8x8xbf16>
      tpu.vector_store %arg12[%c2_60, %c0_61, %c0_62], %98 {strides = array<i32>} : memref<4x8x8xbf16, #tpu.memory_space<vmem>>, vector<1x8x8xbf16>,
      %99 = vector.extract_strided_slice %58 {offsets = [16, 0], sizes = [8, 8], strides = [1, 1]} : vector<32x8xf32> to vector<8x8xf32>
      %100 = arith.truncf %99 : vector<8x8xf32> to vector<8x8xbf16>
      %c2_63 = arith.constant 2 : index
      %c0_64 = arith.constant 0 : index
      %c0_65 = arith.constant 0 : index
      %101 = vector.load %arg11[%c2_63, %c0_64, %c0_65] : memref<4x8x8xbf16, #tpu.memory_space<vmem>>, vector<1x8x8xbf16>
      %102 = vector.shape_cast %101 : vector<1x8x8xbf16> to vector<8x8xbf16>
      %103 = vector.shape_cast %100 : vector<8x8xbf16> to vector<1x8x8xbf16>
      tpu.vector_store %arg11[%c2_63, %c0_64, %c0_65], %103 {strides = array<i32>} : memref<4x8x8xbf16, #tpu.memory_space<vmem>>, vector<1x8x8xbf16>,
      %104 = vector.extract_strided_slice %53 {offsets = [0, 24], sizes = [8, 8], strides = [1, 1]} : vector<8x64xf32> to vector<8x8xf32>
      %105 = arith.truncf %104 : vector<8x8xf32> to vector<8x8xbf16>
      %c3 = arith.constant 3 : index
      %c0_66 = arith.constant 0 : index
      %c0_67 = arith.constant 0 : index
      %106 = vector.load %arg10[%c3, %c0_66, %c0_67] : memref<4x8x8xbf16, #tpu.memory_space<vmem>>, vector<1x8x8xbf16>
      %107 = vector.shape_cast %106 : vector<1x8x8xbf16> to vector<8x8xbf16>
      %108 = vector.shape_cast %105 : vector<8x8xbf16> to vector<1x8x8xbf16>
      tpu.vector_store %arg10[%c3, %c0_66, %c0_67], %108 {strides = array<i32>} : memref<4x8x8xbf16, #tpu.memory_space<vmem>>, vector<1x8x8xbf16>,
      %109 = vector.extract_strided_slice %53 {offsets = [0, 56], sizes = [8, 8], strides = [1, 1]} : vector<8x64xf32> to vector<8x8xf32>
      %110 = arith.truncf %109 : vector<8x8xf32> to vector<8x8xbf16>
      %c3_68 = arith.constant 3 : index
      %c0_69 = arith.constant 0 : index
      %c0_70 = arith.constant 0 : index
      %111 = vector.load %arg12[%c3_68, %c0_69, %c0_70] : memref<4x8x8xbf16, #tpu.memory_space<vmem>>, vector<1x8x8xbf16>
      %112 = vector.shape_cast %111 : vector<1x8x8xbf16> to vector<8x8xbf16>
      %113 = vector.shape_cast %110 : vector<8x8xbf16> to vector<1x8x8xbf16>
      tpu.vector_store %arg12[%c3_68, %c0_69, %c0_70], %113 {strides = array<i32>} : memref<4x8x8xbf16, #tpu.memory_space<vmem>>, vector<1x8x8xbf16>,
      %114 = vector.extract_strided_slice %58 {offsets = [24, 0], sizes = [8, 8], strides = [1, 1]} : vector<32x8xf32> to vector<8x8xf32>
      %115 = arith.truncf %114 : vector<8x8xf32> to vector<8x8xbf16>
      %c3_71 = arith.constant 3 : index
      %c0_72 = arith.constant 0 : index
      %c0_73 = arith.constant 0 : index
      %116 = vector.load %arg11[%c3_71, %c0_72, %c0_73] : memref<4x8x8xbf16, #tpu.memory_space<vmem>>, vector<1x8x8xbf16>
      %117 = vector.shape_cast %116 : vector<1x8x8xbf16> to vector<8x8xbf16>
      %118 = vector.shape_cast %115 : vector<8x8xbf16> to vector<1x8x8xbf16>
      tpu.vector_store %arg11[%c3_71, %c0_72, %c0_73], %118 {strides = array<i32>} : memref<4x8x8xbf16, #tpu.memory_space<vmem>>, vector<1x8x8xbf16>,
    } else {
    }
    %c0 = arith.constant 0 : index
    %c0_1 = arith.constant 0 : index
    %c0_2 = arith.constant 0 : index
    %3 = vector.load %arg10[%c0, %c0_1, %c0_2] : memref<4x8x8xbf16, #tpu.memory_space<vmem>>, vector<4x8x8xbf16>
    %c0_3 = arith.constant 0 : index
    %c0_4 = arith.constant 0 : index
    %c0_5 = arith.constant 0 : index
    %4 = vector.load %arg11[%c0_3, %c0_4, %c0_5] : memref<4x8x8xbf16, #tpu.memory_space<vmem>>, vector<4x8x8xbf16>
    "tpu.trace_start"() <{level = 10 : i32, message = "hqd,hdk->hqk"}> : () -> ()
    %cst = arith.constant dense<0.000000e+00> : vector<4x8x8xf32>
    %5 = tpu.matmul %3, %4, %cst {dimension_numbers = #tpu.dot_dimension_numbers<[2], [1], [1], [2], [0, 0, 0, 1, 1, 2], [0], [0]>} : vector<4x8x8xbf16>, vector<4x8x8xbf16>, vector<4x8x8xf32> -> vector<4x8x8xf32>
    "tpu.trace_stop"() : () -> ()
    %c0_6 = arith.constant 0 : index
    %c0_7 = arith.constant 0 : index
    %c0_8 = arith.constant 0 : index
    %6 = vector.load %arg7[%c0_6, %c0_7, %c0_8] : memref<1x1x8xf32, #tpu.memory_space<vmem>>, vector<1x1x8xf32>
    %7 = vector.shape_cast %6 : vector<1x1x8xf32> to vector<1x8xf32>
    %8 = vector.shape_cast %7 : vector<1x8xf32> to vector<1x1x8xf32>
    %9 = vector.broadcast %8 : vector<1x1x8xf32> to vector<4x8x8xf32>
    %10 = arith.addf %5, %9 : vector<4x8x8xf32>
    %cst_9 = arith.constant dense<0xFF800000> : vector<4x8xf32>
    %11 = vector.multi_reduction <maximumf>, %10, %cst_9 [2] : vector<4x8x8xf32> to vector<4x8xf32>
    %12 = vector.shape_cast %11 : vector<4x8xf32> to vector<4x8x1xf32>
    %13 = vector.broadcast %12 : vector<4x8x1xf32> to vector<4x8x8xf32>
    %14 = arith.subf %10, %13 : vector<4x8x8xf32>
    %15 = math.exp %14 : vector<4x8x8xf32>
    %cst_10 = arith.constant dense<0.000000e+00> : vector<4x8xf32>
    %16 = vector.multi_reduction <add>, %15, %cst_10 [2] : vector<4x8x8xf32> to vector<4x8xf32>
    %17 = vector.shape_cast %16 : vector<4x8xf32> to vector<4x8x1xf32>
    %18 = tpu.reciprocal %17 {approx = true} : vector<4x8x1xf32> -> vector<4x8x1xf32>
    %19 = vector.broadcast %18 : vector<4x8x1xf32> to vector<4x8x8xf32>
    %20 = arith.mulf %15, %19 : vector<4x8x8xf32>
    %c0_11 = arith.constant 0 : index
    %c0_12 = arith.constant 0 : index
    %c0_13 = arith.constant 0 : index
    %c0_14 = arith.constant 0 : index
    %21 = vector.load %arg9[%c0_11, %c0_12, %c0_13, %c0_14] : memref<1x4x8x8xf32, #tpu.memory_space<vmem>>, vector<1x4x8x8xf32>
    %22 = vector.shape_cast %21 : vector<1x4x8x8xf32> to vector<4x8x8xf32>
    %23 = vector.shape_cast %20 : vector<4x8x8xf32> to vector<1x4x8x8xf32>
    tpu.vector_store %arg9[%c0_11, %c0_12, %c0_13, %c0_14], %23 {strides = array<i32>} : memref<1x4x8x8xf32, #tpu.memory_space<vmem>>, vector<1x4x8x8xf32>,
    %24 = arith.truncf %20 : vector<4x8x8xf32> to vector<4x8x8xbf16>
    %c0_15 = arith.constant 0 : index
    %c0_16 = arith.constant 0 : index
    %c0_17 = arith.constant 0 : index
    %25 = vector.load %arg12[%c0_15, %c0_16, %c0_17] : memref<4x8x8xbf16, #tpu.memory_space<vmem>>, vector<4x8x8xbf16>
    "tpu.trace_start"() <{level = 10 : i32, message = "hqk,hkd->hqd"}> : () -> ()
    %cst_18 = arith.constant dense<0.000000e+00> : vector<4x8x8xf32>
    %26 = tpu.matmul %24, %25, %cst_18 {dimension_numbers = #tpu.dot_dimension_numbers<[2], [1], [1], [2], [0, 0, 0, 1, 1, 2], [0], [0]>} : vector<4x8x8xbf16>, vector<4x8x8xbf16>, vector<4x8x8xf32> -> vector<4x8x8xf32>
    "tpu.trace_stop"() : () -> ()
    %27 = vector.extract_strided_slice %26 {offsets = [0, 0, 0], sizes = [1, 8, 8], strides = [1, 1, 1]} : vector<4x8x8xf32> to vector<1x8x8xf32>
    %28 = vector.shape_cast %27 : vector<1x8x8xf32> to vector<8x8xf32>
    %c0_19 = arith.constant 0 : index
    %c0_20 = arith.constant 0 : index
    %c0_21 = arith.constant 0 : index
    %29 = vector.load %arg8[%c0_19, %c0_20, %c0_21] : memref<1x8x32xf32, #tpu.memory_space<vmem>>, vector<1x8x8xf32>
    %30 = vector.shape_cast %29 : vector<1x8x8xf32> to vector<8x8xf32>
    %31 = vector.shape_cast %28 : vector<8x8xf32> to vector<1x8x8xf32>
    tpu.vector_store %arg8[%c0_19, %c0_20, %c0_21], %31 {strides = array<i32>} : memref<1x8x32xf32, #tpu.memory_space<vmem>>, vector<1x8x8xf32>,
    %32 = vector.extract_strided_slice %26 {offsets = [1, 0, 0], sizes = [1, 8, 8], strides = [1, 1, 1]} : vector<4x8x8xf32> to vector<1x8x8xf32>
    %33 = vector.shape_cast %32 : vector<1x8x8xf32> to vector<8x8xf32>
    %c0_22 = arith.constant 0 : index
    %c0_23 = arith.constant 0 : index
    %c8 = arith.constant 8 : index
    %34 = vector.load %arg8[%c0_22, %c0_23, %c8] : memref<1x8x32xf32, #tpu.memory_space<vmem>>, vector<1x8x8xf32>
    %35 = vector.shape_cast %34 : vector<1x8x8xf32> to vector<8x8xf32>
    %36 = vector.shape_cast %33 : vector<8x8xf32> to vector<1x8x8xf32>
    tpu.vector_store %arg8[%c0_22, %c0_23, %c8], %36 {strides = array<i32>} : memref<1x8x32xf32, #tpu.memory_space<vmem>>, vector<1x8x8xf32>,
    %37 = vector.extract_strided_slice %26 {offsets = [2, 0, 0], sizes = [1, 8, 8], strides = [1, 1, 1]} : vector<4x8x8xf32> to vector<1x8x8xf32>
    %38 = vector.shape_cast %37 : vector<1x8x8xf32> to vector<8x8xf32>
    %c0_24 = arith.constant 0 : index
    %c0_25 = arith.constant 0 : index
    %c16 = arith.constant 16 : index
    %39 = vector.load %arg8[%c0_24, %c0_25, %c16] : memref<1x8x32xf32, #tpu.memory_space<vmem>>, vector<1x8x8xf32>
    %40 = vector.shape_cast %39 : vector<1x8x8xf32> to vector<8x8xf32>
    %41 = vector.shape_cast %38 : vector<8x8xf32> to vector<1x8x8xf32>
    tpu.vector_store %arg8[%c0_24, %c0_25, %c16], %41 {strides = array<i32>} : memref<1x8x32xf32, #tpu.memory_space<vmem>>, vector<1x8x8xf32>,
    %42 = vector.extract_strided_slice %26 {offsets = [3, 0, 0], sizes = [1, 8, 8], strides = [1, 1, 1]} : vector<4x8x8xf32> to vector<1x8x8xf32>
    %43 = vector.shape_cast %42 : vector<1x8x8xf32> to vector<8x8xf32>
    %c0_26 = arith.constant 0 : index
    %c0_27 = arith.constant 0 : index
    %c24 = arith.constant 24 : index
    %44 = vector.load %arg8[%c0_26, %c0_27, %c24] : memref<1x8x32xf32, #tpu.memory_space<vmem>>, vector<1x8x8xf32>
    %45 = vector.shape_cast %44 : vector<1x8x8xf32> to vector<8x8xf32>
    %46 = vector.shape_cast %43 : vector<8x8xf32> to vector<1x8x8xf32>
    tpu.vector_store %arg8[%c0_26, %c0_27, %c24], %46 {strides = array<i32>} : memref<1x8x32xf32, #tpu.memory_space<vmem>>, vector<1x8x8xf32>,
    return
  }
  func.func @transform_0(%arg0: i32, %arg1: i32) -> (i32, i32, i32) {
    %c0_i32 = arith.constant 0 : i32
    %c0_i32_0 = arith.constant 0 : i32
    %c0_i32_1 = arith.constant 0 : i32
    return %arg0, %c0_i32, %c0_i32_0 : i32, i32, i32
  }
  func.func @transform_1(%arg0: i32, %arg1: i32) -> (i32, i32) {
    %c0_i32 = arith.constant 0 : i32
    %c0_i32_0 = arith.constant 0 : i32
    %c0_i32_1 = arith.constant 0 : i32
    return %c0_i32, %c0_i32_0 : i32, i32
  }
  func.func @transform_2(%arg0: i32, %arg1: i32) -> (i32, i32) {
    %c0_i32 = arith.constant 0 : i32
    %c0_i32_0 = arith.constant 0 : i32
    %c0_i32_1 = arith.constant 0 : i32
    return %c0_i32, %c0_i32_0 : i32, i32
  }
  func.func @transform_3(%arg0: i32, %arg1: i32) -> (i32, i32) {
    %c0_i32 = arith.constant 0 : i32
    %c0_i32_0 = arith.constant 0 : i32
    %c0_i32_1 = arith.constant 0 : i32
    return %c0_i32, %c0_i32_0 : i32, i32
  }
  func.func @transform_4(%arg0: i32, %arg1: i32) -> (i32, i32) {
    %c0_i32 = arith.constant 0 : i32
    %c0_i32_0 = arith.constant 0 : i32
    %c0_i32_1 = arith.constant 0 : i32
    return %c0_i32, %c0_i32_0 : i32, i32
  }
  func.func @transform_5(%arg0: i32, %arg1: i32) -> (i32, i32, i32) {
    %c0_i32 = arith.constant 0 : i32
    %c0_i32_0 = arith.constant 0 : i32
    %c0_i32_1 = arith.constant 0 : i32
    return %arg0, %c0_i32, %c0_i32_0 : i32, i32, i32
  }
  func.func @transform_6(%arg0: i32, %arg1: i32) -> (i32, i32, i32) {
    %c0_i32 = arith.constant 0 : i32
    %c0_i32_0 = arith.constant 0 : i32
    return %arg0, %arg1, %c0_i32 : i32, i32, i32
  }
  func.func @transform_7(%arg0: i32, %arg1: i32) -> (i32, i32, i32, i32) {
    %c0_i32 = arith.constant 0 : i32
    %c0_i32_0 = arith.constant 0 : i32
    %c0_i32_1 = arith.constant 0 : i32
    return %arg0, %c0_i32, %arg1, %c0_i32_0 : i32, i32, i32, i32
  }
}

</mosaic_0001>

<llo_original>
// kernel: tpu_custom_call.1
$region0: #{tpu_custom_call.1}
  #allocation0 [shape = 'u32[]', space=smem, size = 0x4, offset = 0x4, fixed_abs, tag = 'smem constant byte address 0x4 - core index']
  #allocation1 [shape = 'u32[144,128]{1,0:T(1,128)}', space=vmem, size = 0x12000, scoped, tag = 'internal scratch']
  #allocation2 [shape = 'bf16[4,8,8]{2,1,0:T(8,128)(2,1)}', space=vmem, size = 0x2000, scoped, tag = 'scratch operand']
  #allocation3 [shape = 'bf16[4,8,8]{2,1,0:T(8,128)(2,1)}', space=vmem, size = 0x2000, scoped, tag = 'scratch operand']
  #allocation4 [shape = 'bf16[4,8,8]{2,1,0:T(8,128)(2,1)}', space=vmem, size = 0x2000, scoped, tag = 'scratch operand']
  %s0 = inlined_call_operand.hbm [shape: bf16[2,8,32], index: 0, kind: input, shape index: {}]
  %s1 = inlined_call_operand.vmem [shape: bf16[32,64], index: 1, kind: input, shape index: {}]
  %s2 = inlined_call_operand.vmem [shape: f32[1,64], index: 2, kind: input, shape index: {}]
  %s3 = inlined_call_operand.vmem [shape: bf16[32,32], index: 3, kind: input, shape index: {}]
  %s4 = inlined_call_operand.vmem [shape: f32[32,1], index: 4, kind: input, shape index: {}]
  %s5 = inlined_call_operand.vmem [shape: f32[2,1,8], index: 5, kind: input, shape index: {}]
  %s6 = inlined_call_operand.hbm [shape: f32[2,8,32], index: 6, kind: output, shape index: {0}]
  %s7 = inlined_call_operand.hbm [shape: f32[2,4,8,8], index: 7, kind: output, shape index: {1}]
  %8 = xla_tuple %s6, %s7
  %s9 = sld [smem:[#allocation0]]
  $region73: #{tpu_custom_call.1} parent=0
    _
  %s11 = ssub.s32 1, %s9
  %s12 = scalar_select 0, %s11, %s9
  $region1: #{tpu_custom_call.1} parent=0
    #allocation5 [shape = 'u8[4096]{0}', space=vmem, size = 0x1000, scoped, tag = 'input window, operand 0']
    #allocation6 [shape = 's32[2]{0}', space=sflag, size = 0x8, scoped, tag = 'scoped memory for tpu_custom_call.1']
    #allocation7 [shape = 's32[2]{0}', space=sflag, size = 0x8, scoped, tag = 'scoped memory for tpu_custom_call.1']
    #allocation8 [shape = 'u8[8192]{0}', space=vmem, size = 0x2000, scoped, tag = 'output window, operand 0']
    #allocation9 [shape = 'u8[32768]{0}', space=vmem, size = 0x8000, scoped, tag = 'output window, operand 1']
    #allocation10 [shape = 's32[2]{0}', space=sflag, size = 0x8, scoped, tag = 'scoped memory for tpu_custom_call.1']
    %13 = vsyncpa [#allocation6], 0
    %s14 = scalar_lea.sflag [#allocation6], 1
    %15 = vsyncpa %s14, 0
    %16 = vsyncpa [#allocation7], 0
    %s17 = scalar_lea.sflag [#allocation7], 1
    %18 = vsyncpa %s17, 0
    %19 = vsyncpa [#allocation10], 0
    %s20 = scalar_lea.sflag [#allocation10], 1
    %21 = vsyncpa %s20, 0
    loop: start=0, step=1, limit=4
    $region2: #{tpu_custom_call.1} parent=1 // loop_pre_header
      _
    $region3: #{tpu_custom_call.1} parent=1 // loop_header
      %s23 = sphi 0, %s27
      %p24 = scmp.ge.s32.totalorder %s23, 4
      %s30 = sphi 0, %s42
      %s31 = sphi 0, %s38
      %s32 = sphi 0, %s30
      %s33 = sphi 0, %s31
      %s34 = sphi 0, %s32
      %s35 = sphi 0, %s33
      %s45 = sphi 0, %s47
      %s48 = sphi 0, %s45
      %s49 = sphi 0, %s48
      %s65 = sphi 0, %s49
      %s69 = sphi 0, %s69
      %s71 = sphi 0, %s69
      %s72 = sphi 0, %s71
      %s86 = sphi 0, %s72
      %s90 = sphi 0, %s90
      %s92 = sphi 0, %s90
      %s93 = sphi 0, %s92
      %s107 = sphi 0, %s93
      %s111 = sphi 0, %s111
      %s113 = sphi 0, %s111
      %s114 = sphi 0, %s113
      %s128 = sphi 0, %s114
      %s132 = sphi 0, %s132
      %s134 = sphi 0, %s132
      %s135 = sphi 0, %s134
      %s149 = sphi 0, %s135
      %s155 = sphi 0, %s157
      %s158 = sphi 0, %s155
      %s159 = sphi 0, %s158
      %s175 = sphi 0, %s159
      %s183 = sphi 0, %s185
      %s186 = sphi 0, %s183
      %s187 = sphi 0, %s186
      %s203 = sphi 0, %s187
      %s211 = sphi 0, %s213
      %s214 = sphi 0, %s211
      %s215 = sphi 0, %s214
      %s231 = sphi 0, %s215
    $region4: #{tpu_custom_call.1} parent=1 // loop_header_branch
      %26 = sbr.rel (%p24) target = $region8
    $region5: #{tpu_custom_call.1} parent=1 // loop_body
      %s28 = ssub.s32 %s23, 1
      %s29 = ssub.s32 %s23, 2
      %s36 = sadd.s32 1, %s31
      %p37 = scmp.ge.s32.totalorder %s36, 1
      %s38 = scalar_select %p37, 0, %s36
      %s39 = sadd.s32 1, %s30
      %s40 = scalar_select %p37, %s39, %s30
      %p41 = scmp.ge.s32.totalorder %s40, 2
      %s42 = scalar_select %p41, 0, %s40
      %s43 = ssub.s32 %s30, %s42
      %p44 = scmp.eq.s32.totalorder %s43, 0
      %s46 = sadd.s32 %s45, 1
      %s47 = scalar_select %p44, %s45, %s46
      %p50 = pneg %p44
      %p51 = scmp.eq.s32.totalorder %s23, 1
      %p52 = por %p50, %p51
      %p53 = scmp.ne.s32.totalorder %s45, %s48
      %p54 = scmp.eq.s32.totalorder %s23, 0
      %p55 = por %p53, %p54
      %p56 = scmp.ne.s32.totalorder %s45, %s48
      %p57 = scmp.eq.s32.totalorder %s28, 1
      %p58 = por %p56, %p57
      %p59 = scmp.ne.s32.totalorder %s48, %s49
      %p60 = scmp.eq.s32.totalorder %s28, 0
      %p61 = por %p59, %p60
      %p62 = scmp.ne.s32.totalorder %s48, %s49
      %p63 = scmp.eq.s32.totalorder %s29, 1
      %p64 = por %p62, %p63
      %p66 = scmp.ne.s32.totalorder %s49, %s65
      %p67 = scmp.eq.s32.totalorder %s29, 0
      %p68 = por %p66, %p67
      %s70 = sadd.s32 %s69, 1
      %p73 = scmp.eq.s32.totalorder %s23, 1
      %p74 = scmp.ne.s32.totalorder %s69, %s71
      %p75 = scmp.eq.s32.totalorder %s23, 0
      %p76 = por %p74, %p75
      %p77 = scmp.ne.s32.totalorder %s69, %s71
      %p78 = scmp.eq.s32.totalorder %s28, 1
      %p79 = por %p77, %p78
      %p80 = scmp.ne.s32.totalorder %s71, %s72
      %p81 = scmp.eq.s32.totalorder %s28, 0
      %p82 = por %p80, %p81
      %p83 = scmp.ne.s32.totalorder %s71, %s72
      %p84 = scmp.eq.s32.totalorder %s29, 1
      %p85 = por %p83, %p84
      %p87 = scmp.ne.s32.totalorder %s72, %s86
      %p88 = scmp.eq.s32.totalorder %s29, 0
      %p89 = por %p87, %p88
      %s91 = sadd.s32 %s90, 1
      %p94 = scmp.eq.s32.totalorder %s23, 1
      %p95 = scmp.ne.s32.totalorder %s90, %s92
      %p96 = scmp.eq.s32.totalorder %s23, 0
      %p97 = por %p95, %p96
      %p98 = scmp.ne.s32.totalorder %s90, %s92
      %p99 = scmp.eq.s32.totalorder %s28, 1
      %p100 = por %p98, %p99
      %p101 = scmp.ne.s32.totalorder %s92, %s93
      %p102 = scmp.eq.s32.totalorder %s28, 0
      %p103 = por %p101, %p102
      %p104 = scmp.ne.s32.totalorder %s92, %s93
      %p105 = scmp.eq.s32.totalorder %s29, 1
      %p106 = por %p104, %p105
      %p108 = scmp.ne.s32.totalorder %s93, %s107
      %p109 = scmp.eq.s32.totalorder %s29, 0
      %p110 = por %p108, %p109
      %s112 = sadd.s32 %s111, 1
      %p115 = scmp.eq.s32.totalorder %s23, 1
      %p116 = scmp.ne.s32.totalorder %s111, %s113
      %p117 = scmp.eq.s32.totalorder %s23, 0
      %p118 = por %p116, %p117
      %p119 = scmp.ne.s32.totalorder %s111, %s113
      %p120 = scmp.eq.s32.totalorder %s28, 1
      %p121 = por %p119, %p120
      %p122 = scmp.ne.s32.totalorder %s113, %s114
      %p123 = scmp.eq.s32.totalorder %s28, 0
      %p124 = por %p122, %p123
      %p125 = scmp.ne.s32.totalorder %s113, %s114
      %p126 = scmp.eq.s32.totalorder %s29, 1
      %p127 = por %p125, %p126
      %p129 = scmp.ne.s32.totalorder %s114, %s128
      %p130 = scmp.eq.s32.totalorder %s29, 0
      %p131 = por %p129, %p130
      %s133 = sadd.s32 %s132, 1
      %p136 = scmp.eq.s32.totalorder %s23, 1
      %p137 = scmp.ne.s32.totalorder %s132, %s134
      %p138 = scmp.eq.s32.totalorder %s23, 0
      %p139 = por %p137, %p138
      %p140 = scmp.ne.s32.totalorder %s132, %s134
      %p141 = scmp.eq.s32.totalorder %s28, 1
      %p142 = por %p140, %p141
      %p143 = scmp.ne.s32.totalorder %s134, %s135
      %p144 = scmp.eq.s32.totalorder %s28, 0
      %p145 = por %p143, %p144
      %p146 = scmp.ne.s32.totalorder %s134, %s135
      %p147 = scmp.eq.s32.totalorder %s29, 1
      %p148 = por %p146, %p147
      %p150 = scmp.ne.s32.totalorder %s135, %s149
      %p151 = scmp.eq.s32.totalorder %s29, 0
      %p152 = por %p150, %p151
      %s153 = ssub.s32 %s30, %s42
      %p154 = scmp.eq.s32.totalorder %s153, 0
      %s156 = sadd.s32 %s155, 1
      %s157 = scalar_select %p154, %s155, %s156
      %p160 = pneg %p154
      %p161 = scmp.eq.s32.totalorder %s23, 1
      %p162 = por %p160, %p161
      %p163 = scmp.ne.s32.totalorder %s155, %s158
      %p164 = scmp.eq.s32.totalorder %s23, 0
      %p165 = por %p163, %p164
      %p166 = scmp.ne.s32.totalorder %s155, %s158
      %p167 = scmp.eq.s32.totalorder %s28, 1
      %p168 = por %p166, %p167
      %p169 = scmp.ne.s32.totalorder %s158, %s159
      %p170 = scmp.eq.s32.totalorder %s28, 0
      %p171 = por %p169, %p170
      %p172 = scmp.ne.s32.totalorder %s158, %s159
      %p173 = scmp.eq.s32.totalorder %s29, 1
      %p174 = por %p172, %p173
      %p176 = scmp.ne.s32.totalorder %s159, %s175
      %p177 = scmp.eq.s32.totalorder %s29, 0
      %p178 = por %p176, %p177
      %s179 = ssub.s32 %s30, %s42
      %s180 = ssub.s32 %s31, %s38
      %s181 = sor.u32 %s179, %s180
      %p182 = scmp.eq.s32.totalorder %s181, 0
      %s184 = sadd.s32 %s183, 1
      %s185 = scalar_select %p182, %s183, %s184
      %p188 = pneg %p182
      %p189 = scmp.eq.s32.totalorder %s23, 1
      %p190 = por %p188, %p189
      %p191 = scmp.ne.s32.totalorder %s183, %s186
      %p192 = scmp.eq.s32.totalorder %s23, 0
      %p193 = por %p191, %p192
      %p194 = scmp.ne.s32.totalorder %s183, %s186
      %p195 = scmp.eq.s32.totalorder %s28, 1
      %p196 = por %p194, %p195
      %p197 = scmp.ne.s32.totalorder %s186, %s187
      %p198 = scmp.eq.s32.totalorder %s28, 0
      %p199 = por %p197, %p198
      %p200 = scmp.ne.s32.totalorder %s186, %s187
      %p201 = scmp.eq.s32.totalorder %s29, 1
      %p202 = por %p200, %p201
      %p204 = scmp.ne.s32.totalorder %s187, %s203
      %p205 = scmp.eq.s32.totalorder %s29, 0
      %p206 = por %p204, %p205
      %s207 = ssub.s32 %s30, %s42
      %s208 = ssub.s32 %s31, %s38
      %s209 = sor.u32 %s207, %s208
      %p210 = scmp.eq.s32.totalorder %s209, 0
      %s212 = sadd.s32 %s211, 1
      %s213 = scalar_select %p210, %s211, %s212
      %p216 = pneg %p210
      %p217 = scmp.eq.s32.totalorder %s23, 1
      %p218 = por %p216, %p217
      %p219 = scmp.ne.s32.totalorder %s211, %s214
      %p220 = scmp.eq.s32.totalorder %s23, 0
      %p221 = por %p219, %p220
      %p222 = scmp.ne.s32.totalorder %s211, %s214
      %p223 = scmp.eq.s32.totalorder %s28, 1
      %p224 = por %p222, %p223
      %p225 = scmp.ne.s32.totalorder %s214, %s215
      %p226 = scmp.eq.s32.totalorder %s28, 0
      %p227 = por %p225, %p226
      %p228 = scmp.ne.s32.totalorder %s214, %s215
      %p229 = scmp.eq.s32.totalorder %s29, 1
      %p230 = por %p228, %p229
      %p232 = scmp.ne.s32.totalorder %s215, %s231
      %p233 = scmp.eq.s32.totalorder %s29, 0
      %p234 = por %p232, %p233
      %p235 = scmp.le.s32.totalorder 1, %s23
      %p236 = scmp.lt.s32.totalorder %s23, 3
      %p237 = pnand %p235, %p236
      %p238 = pneg %p237
      // Predicated region
      $region9: #{tpu_custom_call.1} parent=5 // pred_check
        _
      $region10: #{tpu_custom_call.1} parent=5 // pred_check_branch
        %240 = sbr.rel (%p237) target = $region12
      $region11: #{tpu_custom_call.1} parent=5 // pred_region
        %s241 = ssub.s32 %s23, 1
        // Predicated region
        $region13: #{tpu_custom_call.1} parent=11 // pred_check
          %p242 = pneg %p82
        $region14: #{tpu_custom_call.1} parent=11 // pred_check_branch
          %244 = sbr.rel (%p242) target = $region16
        $region15: #{tpu_custom_call.1} parent=11 // pred_region
          _
        $region16: #{tpu_custom_call.1} parent=11 // pred_fallthru
          _
        // Predicated region
        $region17: #{tpu_custom_call.1} parent=11 // pred_check
          %p245 = pneg %p103
        $region18: #{tpu_custom_call.1} parent=11 // pred_check_branch
          %247 = sbr.rel (%p245) target = $region20
        $region19: #{tpu_custom_call.1} parent=11 // pred_region
          _
        $region20: #{tpu_custom_call.1} parent=11 // pred_fallthru
          _
        // Predicated region
        $region21: #{tpu_custom_call.1} parent=11 // pred_check
          %p248 = pneg %p124
        $region22: #{tpu_custom_call.1} parent=11 // pred_check_branch
          %250 = sbr.rel (%p248) target = $region24
        $region23: #{tpu_custom_call.1} parent=11 // pred_region
          _
        $region24: #{tpu_custom_call.1} parent=11 // pred_fallthru
          _
        // Predicated region
        $region25: #{tpu_custom_call.1} parent=11 // pred_check
          %p251 = pneg %p145
        $region26: #{tpu_custom_call.1} parent=11 // pred_check_branch
          %253 = sbr.rel (%p251) target = $region28
        $region27: #{tpu_custom_call.1} parent=11 // pred_region
          _
        $region28: #{tpu_custom_call.1} parent=11 // pred_fallthru
          _
      $region12: #{tpu_custom_call.1} parent=5 // pred_fallthru
        _
      %p254 = scmp.lt.s32.totalorder %s23, 2
      // Predicated region
      $region29: #{tpu_custom_call.1} parent=5 // pred_check
        %p255 = pneg %p254
      $region30: #{tpu_custom_call.1} parent=5 // pred_check_branch
        %257 = sbr.rel (%p255) target = $region32
      $region31: #{tpu_custom_call.1} parent=5 // pred_region
        // Predicated region
        $region33: #{tpu_custom_call.1} parent=31 // pred_check
          %p258 = pneg %p55
        $region34: #{tpu_custom_call.1} parent=31 // pred_check_branch
          %260 = sbr.rel (%p258) target = $region36
        $region35: #{tpu_custom_call.1} parent=31 // pred_region
          %s261 = sand.u32 %s45, 1
          %s262 = scalar_lea.sflag [#allocation6], %s261
          %s263 = sand.u32 %s45, 1
          %s264 = smul.addr %s263, 4
          %s265 = scalar_lea.vmem [#allocation5], %s264
          %s267 = ssub.s32 64, 64
          %268 = vsyncadd %s262, %s267
          %s269 = smul.addr %s30, 64
          %s270 = scalar_lea.hbm %s0, %s269
          %s272 = sshll.u32 %s265, 4
          %s273 = int_to_ptr.vmem [resolvable:$true] %s272
          %275 = dma.hbm_to_vmem [thread:$0]  %s270, 64, %s273, %s262
        $region36: #{tpu_custom_call.1} parent=31 // pred_fallthru
          _
        // Predicated region
        $region37: #{tpu_custom_call.1} parent=31 // pred_check
          %p276 = pneg %p165
        $region38: #{tpu_custom_call.1} parent=31 // pred_check_branch
          %278 = sbr.rel (%p276) target = $region40
        $region39: #{tpu_custom_call.1} parent=31 // pred_region
          %p279 = scmp.lt.s32.totalorder %s30, 1
          %s280 = scalar_select %p279, %s30, 1
          %s281 = scalar_lea.vmem %s5, %s280
        $region40: #{tpu_custom_call.1} parent=31 // pred_fallthru
          _
      $region32: #{tpu_custom_call.1} parent=5 // pred_fallthru
        _
      %p282 = scmp.le.s32.totalorder 1, %s23
      %p283 = scmp.lt.s32.totalorder %s23, 3
      %p284 = pnand %p282, %p283
      %p285 = pneg %p284
      // Predicated region
      $region41: #{tpu_custom_call.1} parent=5 // pred_check
        _
      $region42: #{tpu_custom_call.1} parent=5 // pred_check_branch
        %287 = sbr.rel (%p284) target = $region44
      $region43: #{tpu_custom_call.1} parent=5 // pred_region
        %s288 = ssub.s32 %s23, 1
        %s289 = sand.u32 %s48, 1
        %s290 = scalar_lea.sflag [#allocation6], %s289
        %s291 = sand.u32 %s48, 1
        %s292 = smul.addr %s291, 4
        %s293 = scalar_lea.vmem [#allocation5], %s292
        // Predicated region
        $region45: #{tpu_custom_call.1} parent=43 // pred_check
          %p294 = pneg %p61
        $region46: #{tpu_custom_call.1} parent=43 // pred_check_branch
          %296 = sbr.rel (%p294) target = $region48
        $region47: #{tpu_custom_call.1} parent=43 // pred_region
          %297 = dma.done %s290, 64
        $region48: #{tpu_custom_call.1} parent=43 // pred_fallthru
          _
        %s298 = sand.u32 %s48, 1
        %s299 = scalar_lea.sflag [#allocation6], %s298
        %s300 = sand.u32 %s48, 1
        %s301 = smul.addr %s300, 4
        %s302 = scalar_lea.vmem [#allocation5], %s301
        %p303 = pneg %p61
        %p304 = pneg %p58
        %p305 = pneg %p82
        %p306 = pneg %p79
        %p307 = pneg %p103
        %p308 = pneg %p100
        %p309 = pneg %p124
        %p310 = pneg %p121
        %p311 = pneg %p145
        %p312 = pneg %p142
        %p313 = scmp.lt.s32.totalorder %s32, 1
        %s314 = scalar_select %p313, %s32, 1
        %s315 = scalar_lea.vmem %s5, %s314
        %p316 = pneg %p171
        %p317 = pneg %p168
        %p318 = pneg %p199
        %p319 = pneg %p196
        %s320 = sand.u32 %s186, 1
        %s321 = scalar_lea.sflag [#allocation7], %s320
        %s322 = sand.u32 %s186, 1
        %s323 = smul.addr %s322, 8
        %s324 = scalar_lea.vmem [#allocation8], %s323
        %p325 = pneg %p227
        %p326 = pneg %p224
        %s327 = sand.u32 %s214, 1
        %s328 = scalar_lea.sflag [#allocation10], %s327
        %s329 = sand.u32 %s214, 1
        %s330 = smul.addr %s329, 32
        %s331 = scalar_lea.vmem [#allocation9], %s330
        %p332 = scmp.lt.s32.totalorder %s32, 1
        %s333 = scalar_select %p332, %s32, 1
        %s334 = scalar_lea.vmem %s5, %s333
        %p336 = scmp.eq.s32.totalorder %s33, 0
        // Predicated region
        $region49: #{tpu_custom_call.1} parent=43 // pred_check
          %p337 = pneg %p336
        $region50: #{tpu_custom_call.1} parent=43 // pred_check_branch
          %339 = sbr.rel (%p337) target = $region52
        $region51: #{tpu_custom_call.1} parent=43 // pred_region
          %v340 = vld [vmem:[%s293] sm:$0xf]
          %v341 = vld [vmem:[%s1] sm:$0xf]
          %v342 = vld [vmem:[%s1 + $0x4] sm:$0xf]
          %v343 = vld [vmem:[%s1 + $0x8] sm:$0xf]
          %v344 = vld [vmem:[%s1 + $0xc] sm:$0xf]
          %v345 = vld [vmem:[%s2] sm:$0x1]
          %v347 = vlaneseq
          %v348 = vshrl.u32 %v347, 7
          %v349 = vsub.s32 0, %v348
          %v350 = vrot.slane %v345, %v349
          %v356 = vunpack.c.l.b16 %v341
          %v357 = vunpack.c.l.b16 %v342
          %v358 = vunpack.c.l.b16 %v343
          %v359 = vunpack.c.l.b16 %v344
          %v360 = vpack.c.b16 %v357, %v356
          %v361 = vpack.c.b16 %v359, %v358
          %vm364 = vcmask 261120
          %v366 = vsel %vm364, %v340, 0
          %368 = vmatprep.subr.bf16.mxu0 0
          %369 = vmatpush1.bf16.msra.mxu0 %v360
          %370 = vmatprep.subr.bf16.mxu0 0
          %371 = vmatpush1.bf16.msra.mxu0 %v361
          %372 = vmatprep.subr.bf16.mxu0 0
          %373 = vmatpush1.bf16.msra.mxu0 0
          %374 = vmatprep.subr.bf16.mxu0 0
          %375 = vmatpush1.bf16.msra.mxu0 0
          %376 = vmatprep.subr.bf16.mxu0 0
          %377 = vmatpush1.bf16.msra.mxu0 0
          %378 = vmatprep.subr.bf16.mxu0 0
          %379 = vmatpush1.bf16.msra.mxu0 0
          %380 = vmatprep.subr.bf16.mxu0 0
          %381 = vmatpush1.bf16.msra.mxu0 0
          %382 = vmatprep.subr.bf16.mxu0 0
          %383 = vmatpush1.bf16.msra.mxu0 0
          %384 = vmatprep.subr.bf16.mxu0 0
          %385 = vmatpush1.bf16.msra.mxu0 0
          %386 = vmatprep.subr.bf16.mxu0 0
          %387 = vmatpush1.bf16.msra.mxu0 0
          %388 = vmatprep.subr.bf16.mxu0 0
          %389 = vmatpush1.bf16.msra.mxu0 0
          %390 = vmatprep.subr.bf16.mxu0 0
          %391 = vmatpush1.bf16.msra.mxu0 0
          %392 = vmatprep.subr.bf16.mxu0 0
          %393 = vmatpush1.bf16.msra.mxu0 0
          %394 = vmatprep.subr.bf16.mxu0 0
          %395 = vmatpush1.bf16.msra.mxu0 0
          %396 = vmatprep.subr.bf16.mxu0 0
          %397 = vmatpush1.bf16.msra.mxu0 0
          %398 = vmatprep.subr.bf16.mxu0 0
          %399 = vmatpush1.bf16.msra.mxu0 0
          %400 = vmatprep.mubr.bf16.mxu0 0
          %401 = vmatmul.mubr.bf16.gmra.mrb[0].mxu0 %v366
          %v402 = vpop.f32.mrb[0].mxu0
          %v403 = vadd.f32 %v350, %v402
          %v404 = vpop.f32.mrb[0].mxu0
          %v405 = vpop.f32.mrb[0].mxu0
          %v406 = vpop.f32.mrb[0].mxu0
          %407 = vdwg.mxu0
          %v408 = vld [vmem:[%s3] sm:$0xf]
          %v409 = vld [vmem:[%s3 + $0x4] sm:$0xf]
          %v410 = vld [vmem:[%s3 + $0x8] sm:$0xf]
          %v411 = vld [vmem:[%s3 + $0xc] sm:$0xf]
          %v412 = vld [vmem:[%s4] sm:$0xff]
          %v413 = vld [vmem:[%s4 + $0x8] sm:$0xff]
          %v414 = vld [vmem:[%s4 + $0x10] sm:$0xff]
          %v415 = vld [vmem:[%s4 + $0x18] sm:$0xff]
          %417 = vset.pattern.permute.xlu0 0
          %418 = vperm.xlu0 %417, %v412
          %v419 = vpop.permute.xlu0 %418
          %422 = vset.pattern.permute.xlu0 0
          %423 = vperm.xlu0 %422, %v413
          %v424 = vpop.permute.xlu0 %423
          %427 = vset.pattern.permute.xlu0 0
          %428 = vperm.xlu0 %427, %v414
          %v429 = vpop.permute.xlu0 %428
          %432 = vset.pattern.permute.xlu0 0
          %433 = vperm.xlu0 %432, %v415
          %v434 = vpop.permute.xlu0 %433
          %v440 = vunpack.c.l.b16 %v408
          %v441 = vunpack.c.l.b16 %v409
          %v442 = vunpack.c.l.b16 %v410
          %v443 = vunpack.c.l.b16 %v411
          %v444 = vpack.c.b16 %v441, %v440
          %v445 = vpack.c.b16 %v443, %v442
          %v447 = vsel %vm364, %v444, 0
          %v450 = vsel %vm364, %v445, 0
          %452 = vmatprep.subr.bf16.mxu0 0
          %453 = vmatpush1.bf16.xpose.msra.mxu0 %v366
          %454 = vmatprep.subr.bf16.mxu0 0
          %455 = vmatpush1.bf16.xpose.msra.mxu0 0
          %456 = vmatprep.subr.bf16.mxu0 0
          %457 = vmatpush1.bf16.xpose.msra.mxu0 0
          %458 = vmatprep.subr.bf16.mxu0 0
          %459 = vmatpush1.bf16.xpose.msra.mxu0 0
          %460 = vmatprep.subr.bf16.mxu0 0
          %461 = vmatpush1.bf16.xpose.msra.mxu0 0
          %462 = vmatprep.subr.bf16.mxu0 0
          %463 = vmatpush1.bf16.xpose.msra.mxu0 0
          %464 = vmatprep.subr.bf16.mxu0 0
          %465 = vmatpush1.bf16.xpose.msra.mxu0 0
          %466 = vmatprep.subr.bf16.mxu0 0
          %467 = vmatpush1.bf16.xpose.msra.mxu0 0
          %468 = vmatprep.subr.bf16.mxu0 0
          %469 = vmatpush1.bf16.xpose.msra.mxu0 0
          %470 = vmatprep.subr.bf16.mxu0 0
          %471 = vmatpush1.bf16.xpose.msra.mxu0 0
          %472 = vmatprep.subr.bf16.mxu0 0
          %473 = vmatpush1.bf16.xpose.msra.mxu0 0
          %474 = vmatprep.subr.bf16.mxu0 0
          %475 = vmatpush1.bf16.xpose.msra.mxu0 0
          %476 = vmatprep.subr.bf16.mxu0 0
          %477 = vmatpush1.bf16.xpose.msra.mxu0 0
          %478 = vmatprep.subr.bf16.mxu0 0
          %479 = vmatpush1.bf16.xpose.msra.mxu0 0
          %480 = vmatprep.subr.bf16.mxu0 0
          %481 = vmatpush1.bf16.xpose.msra.mxu0 0
          %482 = vmatprep.subr.bf16.mxu0 0
          %483 = vmatpush1.bf16.xpose.msra.mxu0 0
          %484 = vmatprep.mubr.bf16.mxu0 0
          %485 = vmatmul.mubr.bf16.gmra.mrb[0].mxu0 %v447
          %v486 = vpop.f32.mrb[0].mxu0
          %v487 = vadd.f32 %v419, %v486
          %v488 = vpop.f32.mrb[0].mxu0
          %v489 = vpop.f32.mrb[0].mxu0
          %v490 = vadd.f32 %v424, %v489
          %v491 = vpop.f32.mrb[0].mxu0
          %492 = vmatprep.mubr.bf16.mxu0 0
          %493 = vmatmul.mubr.bf16.gmra.mrb[0].mxu0 %v450
          %v494 = vpop.f32.mrb[0].mxu0
          %v495 = vadd.f32 %v429, %v494
          %v496 = vpop.f32.mrb[0].mxu0
          %v497 = vpop.f32.mrb[0].mxu0
          %v498 = vadd.f32 %v434, %v497
          %v499 = vpop.f32.mrb[0].mxu0
          %500 = vdwg.mxu0
          %v501 = vpack.c.bf16 %v403, %v403
          %vm502 = vcmask 60416
          %503 = vst.msk [vmem:[#allocation2] sm:$0xf] %vm502, %v501
          %v505 = vunpack.c.l.b16 %v501
          %v506 = vpack.c.b16 %v505, %v505
          %507 = vrot.lane.b32.xlu0 %v506, 96
          %v508 = vpop.permute.xlu0 %507
          %510 = vst.msk [vmem:[#allocation4] sm:$0xf] %vm502, %v508
          %v511 = vpack.c.bf16 %v487, %v487
          %512 = vst.msk [vmem:[#allocation3] sm:$0xf] %vm502, %v511
          %513 = vrot.lane.b32.xlu0 %v506, 120
          %v514 = vpop.permute.xlu0 %513
          %s516 = scalar_lea.vmem [#allocation2], 4
          %517 = vst.msk [vmem:[%s516] sm:$0xf] %vm502, %v514
          %518 = vrot.lane.b32.xlu0 %v506, 88
          %v519 = vpop.permute.xlu0 %518
          %s521 = scalar_lea.vmem [#allocation4], 4
          %522 = vst.msk [vmem:[%s521] sm:$0xf] %vm502, %v519
          %v523 = vpack.c.bf16 %v490, %v490
          %s524 = scalar_lea.vmem [#allocation3], 4
          %525 = vst.msk [vmem:[%s524] sm:$0xf] %vm502, %v523
          %526 = vrot.lane.b32.xlu0 %v506, 112
          %v527 = vpop.permute.xlu0 %526
          %s529 = scalar_lea.vmem [#allocation2], 8
          %530 = vst.msk [vmem:[%s529] sm:$0xf] %vm502, %v527
          %531 = vrot.lane.b32.xlu0 %v506, 80
          %v532 = vpop.permute.xlu0 %531
          %s534 = scalar_lea.vmem [#allocation4], 8
          %535 = vst.msk [vmem:[%s534] sm:$0xf] %vm502, %v532
          %v536 = vpack.c.bf16 %v495, %v495
          %s537 = scalar_lea.vmem [#allocation3], 8
          %538 = vst.msk [vmem:[%s537] sm:$0xf] %vm502, %v536
          %539 = vrot.lane.b32.xlu0 %v506, 104
          %v540 = vpop.permute.xlu0 %539
          %s542 = scalar_lea.vmem [#allocation2], 12
          %543 = vst.msk [vmem:[%s542] sm:$0xf] %vm502, %v540
          %544 = vrot.lane.b32.xlu0 %v506, 72
          %v545 = vpop.permute.xlu0 %544
          %s547 = scalar_lea.vmem [#allocation4], 12
          %548 = vst.msk [vmem:[%s547] sm:$0xf] %vm502, %v545
          %v549 = vpack.c.bf16 %v498, %v498
          %s550 = scalar_lea.vmem [#allocation3], 12
          %551 = vst.msk [vmem:[%s550] sm:$0xf] %vm502, %v549
        $region52: #{tpu_custom_call.1} parent=43 // pred_fallthru
          _
        %v552 = vld [vmem:[#allocation2] sm:$0xf]
        %v553 = vld [vmem:[#allocation2 + $0x4] sm:$0xf]
        %v554 = vld [vmem:[#allocation2 + $0x8] sm:$0xf]
        %v555 = vld [vmem:[#allocation2 + $0xc] sm:$0xf]
        %v556 = vld [vmem:[#allocation3] sm:$0xf]
        %v557 = vld [vmem:[#allocation3 + $0x4] sm:$0xf]
        %v558 = vld [vmem:[#allocation3 + $0x8] sm:$0xf]
        %v559 = vld [vmem:[#allocation3 + $0xc] sm:$0xf]
        %v560 = vld [vmem:[%s334] sm:$0x1]
        %v562 = vlaneseq
        %v563 = vshrl.u32 %v562, 7
        %v564 = vsub.s32 0, %v563
        %v565 = vrot.slane %v560, %v564
        %vm567 = vcmask 64512
        %v569 = vsel %vm567, %v552, 0
        %vm571 = vcmask 1043456
        %v573 = vsel %vm571, %v556, 0
        %575 = vmatprep.subr.bf16.mxu0 0
        %576 = vmatpush1.bf16.msra.mxu0 %v573
        %577 = vmatprep.subr.bf16.mxu0 0
        %578 = vmatpush1.bf16.msra.mxu0 0
        %579 = vmatprep.subr.bf16.mxu0 0
        %580 = vmatpush1.bf16.msra.mxu0 0
        %581 = vmatprep.subr.bf16.mxu0 0
        %582 = vmatpush1.bf16.msra.mxu0 0
        %583 = vmatprep.subr.bf16.mxu0 0
        %584 = vmatpush1.bf16.msra.mxu0 0
        %585 = vmatprep.subr.bf16.mxu0 0
        %586 = vmatpush1.bf16.msra.mxu0 0
        %587 = vmatprep.subr.bf16.mxu0 0
        %588 = vmatpush1.bf16.msra.mxu0 0
        %589 = vmatprep.subr.bf16.mxu0 0
        %590 = vmatpush1.bf16.msra.mxu0 0
        %591 = vmatprep.subr.bf16.mxu0 0
        %592 = vmatpush1.bf16.msra.mxu0 0
        %593 = vmatprep.subr.bf16.mxu0 0
        %594 = vmatpush1.bf16.msra.mxu0 0
        %595 = vmatprep.subr.bf16.mxu0 0
        %596 = vmatpush1.bf16.msra.mxu0 0
        %597 = vmatprep.subr.bf16.mxu0 0
        %598 = vmatpush1.bf16.msra.mxu0 0
        %599 = vmatprep.subr.bf16.mxu0 0
        %600 = vmatpush1.bf16.msra.mxu0 0
        %601 = vmatprep.subr.bf16.mxu0 0
        %602 = vmatpush1.bf16.msra.mxu0 0
        %603 = vmatprep.subr.bf16.mxu0 0
        %604 = vmatpush1.bf16.msra.mxu0 0
        %605 = vmatprep.subr.bf16.mxu0 0
        %606 = vmatpush1.bf16.msra.mxu0 0
        %607 = vmatprep.mubr.bf16.mxu0 0
        %608 = vmatmul.mubr.bf16.gmra.mrb[0].mxu0 %v569
        %v609 = vpop.f32.mrb[0].mxu0
        %v610 = vadd.f32 %v565, %v609
        %v611 = vpop.f32.mrb[0].mxu0
        %v612 = vpop.f32.mrb[0].mxu0
        %v613 = vpop.f32.mrb[0].mxu0
        %614 = vdwg.mxu0
        %v616 = vsel %vm567, %v553, 0
        %v619 = vsel %vm571, %v557, 0
        %621 = vmatprep.subr.bf16.mxu0 0
        %622 = vmatpush1.bf16.msra.mxu0 %v619
        %623 = vmatprep.subr.bf16.mxu0 0
        %624 = vmatpush1.bf16.msra.mxu0 0
        %625 = vmatprep.subr.bf16.mxu0 0
        %626 = vmatpush1.bf16.msra.mxu0 0
        %627 = vmatprep.subr.bf16.mxu0 0
        %628 = vmatpush1.bf16.msra.mxu0 0
        %629 = vmatprep.subr.bf16.mxu0 0
        %630 = vmatpush1.bf16.msra.mxu0 0
        %631 = vmatprep.subr.bf16.mxu0 0
        %632 = vmatpush1.bf16.msra.mxu0 0
        %633 = vmatprep.subr.bf16.mxu0 0
        %634 = vmatpush1.bf16.msra.mxu0 0
        %635 = vmatprep.subr.bf16.mxu0 0
        %636 = vmatpush1.bf16.msra.mxu0 0
        %637 = vmatprep.subr.bf16.mxu0 0
        %638 = vmatpush1.bf16.msra.mxu0 0
        %639 = vmatprep.subr.bf16.mxu0 0
        %640 = vmatpush1.bf16.msra.mxu0 0
        %641 = vmatprep.subr.bf16.mxu0 0
        %642 = vmatpush1.bf16.msra.mxu0 0
        %643 = vmatprep.subr.bf16.mxu0 0
        %644 = vmatpush1.bf16.msra.mxu0 0
        %645 = vmatprep.subr.bf16.mxu0 0
        %646 = vmatpush1.bf16.msra.mxu0 0
        %647 = vmatprep.subr.bf16.mxu0 0
        %648 = vmatpush1.bf16.msra.mxu0 0
        %649 = vmatprep.subr.bf16.mxu0 0
        %650 = vmatpush1.bf16.msra.mxu0 0
        %651 = vmatprep.subr.bf16.mxu0 0
        %652 = vmatpush1.bf16.msra.mxu0 0
        %653 = vmatprep.mubr.bf16.mxu0 0
        %654 = vmatmul.mubr.bf16.gmra.mrb[0].mxu0 %v616
        %v655 = vpop.f32.mrb[0].mxu0
        %v656 = vadd.f32 %v565, %v655
        %v657 = vpop.f32.mrb[0].mxu0
        %v658 = vpop.f32.mrb[0].mxu0
        %v659 = vpop.f32.mrb[0].mxu0
        %660 = vdwg.mxu0
        %v662 = vsel %vm567, %v554, 0
        %v665 = vsel %vm571, %v558, 0
        %667 = vmatprep.subr.bf16.mxu0 0
        %668 = vmatpush1.bf16.msra.mxu0 %v665
        %669 = vmatprep.subr.bf16.mxu0 0
        %670 = vmatpush1.bf16.msra.mxu0 0
        %671 = vmatprep.subr.bf16.mxu0 0
        %672 = vmatpush1.bf16.msra.mxu0 0
        %673 = vmatprep.subr.bf16.mxu0 0
        %674 = vmatpush1.bf16.msra.mxu0 0
        %675 = vmatprep.subr.bf16.mxu0 0
        %676 = vmatpush1.bf16.msra.mxu0 0
        %677 = vmatprep.subr.bf16.mxu0 0
        %678 = vmatpush1.bf16.msra.mxu0 0
        %679 = vmatprep.subr.bf16.mxu0 0
        %680 = vmatpush1.bf16.msra.mxu0 0
        %681 = vmatprep.subr.bf16.mxu0 0
        %682 = vmatpush1.bf16.msra.mxu0 0
        %683 = vmatprep.subr.bf16.mxu0 0
        %684 = vmatpush1.bf16.msra.mxu0 0
        %685 = vmatprep.subr.bf16.mxu0 0
        %686 = vmatpush1.bf16.msra.mxu0 0
        %687 = vmatprep.subr.bf16.mxu0 0
        %688 = vmatpush1.bf16.msra.mxu0 0
        %689 = vmatprep.subr.bf16.mxu0 0
        %690 = vmatpush1.bf16.msra.mxu0 0
        %691 = vmatprep.subr.bf16.mxu0 0
        %692 = vmatpush1.bf16.msra.mxu0 0
        %693 = vmatprep.subr.bf16.mxu0 0
        %694 = vmatpush1.bf16.msra.mxu0 0
        %695 = vmatprep.subr.bf16.mxu0 0
        %696 = vmatpush1.bf16.msra.mxu0 0
        %697 = vmatprep.subr.bf16.mxu0 0
        %698 = vmatpush1.bf16.msra.mxu0 0
        %699 = vmatprep.mubr.bf16.mxu0 0
        %700 = vmatmul.mubr.bf16.gmra.mrb[0].mxu0 %v662
        %v701 = vpop.f32.mrb[0].mxu0
        %v702 = vadd.f32 %v565, %v701
        %v703 = vpop.f32.mrb[0].mxu0
        %v704 = vpop.f32.mrb[0].mxu0
        %v705 = vpop.f32.mrb[0].mxu0
        %706 = vdwg.mxu0
        %v708 = vsel %vm567, %v555, 0
        %v711 = vsel %vm571, %v559, 0
        %713 = vmatprep.subr.bf16.mxu0 0
        %714 = vmatpush1.bf16.msra.mxu0 %v711
        %715 = vmatprep.subr.bf16.mxu0 0
        %716 = vmatpush1.bf16.msra.mxu0 0
        %717 = vmatprep.subr.bf16.mxu0 0
        %718 = vmatpush1.bf16.msra.mxu0 0
        %719 = vmatprep.subr.bf16.mxu0 0
        %720 = vmatpush1.bf16.msra.mxu0 0
        %721 = vmatprep.subr.bf16.mxu0 0
        %722 = vmatpush1.bf16.msra.mxu0 0
        %723 = vmatprep.subr.bf16.mxu0 0
        %724 = vmatpush1.bf16.msra.mxu0 0
        %725 = vmatprep.subr.bf16.mxu0 0
        %726 = vmatpush1.bf16.msra.mxu0 0
        %727 = vmatprep.subr.bf16.mxu0 0
        %728 = vmatpush1.bf16.msra.mxu0 0
        %729 = vmatprep.subr.bf16.mxu0 0
        %730 = vmatpush1.bf16.msra.mxu0 0
        %731 = vmatprep.subr.bf16.mxu0 0
        %732 = vmatpush1.bf16.msra.mxu0 0
        %733 = vmatprep.subr.bf16.mxu0 0
        %734 = vmatpush1.bf16.msra.mxu0 0
        %735 = vmatprep.subr.bf16.mxu0 0
        %736 = vmatpush1.bf16.msra.mxu0 0
        %737 = vmatprep.subr.bf16.mxu0 0
        %738 = vmatpush1.bf16.msra.mxu0 0
        %739 = vmatprep.subr.bf16.mxu0 0
        %740 = vmatpush1.bf16.msra.mxu0 0
        %741 = vmatprep.subr.bf16.mxu0 0
        %742 = vmatpush1.bf16.msra.mxu0 0
        %743 = vmatprep.subr.bf16.mxu0 0
        %744 = vmatpush1.bf16.msra.mxu0 0
        %745 = vmatprep.mubr.bf16.mxu0 0
        %746 = vmatmul.mubr.bf16.gmra.mrb[0].mxu0 %v708
        %v747 = vpop.f32.mrb[0].mxu0
        %v748 = vadd.f32 %v565, %v747
        %v749 = vpop.f32.mrb[0].mxu0
        %v750 = vpop.f32.mrb[0].mxu0
        %v751 = vpop.f32.mrb[0].mxu0
        %752 = vdwg.mxu0
        %v753 = vsel %vm567, %v610, -inf
        %754 = vmax.xlane.f32.xlu0 %v753
        %v755 = vpop.xlane.xlu0 %754
        %v756 = vsel %vm567, %v656, -inf
        %757 = vmax.xlane.f32.xlu0 %v756
        %v758 = vpop.xlane.xlu0 %757
        %v759 = vsel %vm567, %v702, -inf
        %760 = vmax.xlane.f32.xlu0 %v759
        %v761 = vpop.xlane.xlu0 %760
        %v762 = vsel %vm567, %v748, -inf
        %763 = vmax.xlane.f32.xlu0 %v762
        %v764 = vpop.xlane.xlu0 %763
        %v765 = vsub.f32 %v610, %v755
        %v766 = vsub.f32 %v656, %v758
        %v767 = vsub.f32 %v702, %v761
        %v768 = vsub.f32 %v748, %v764
        %v769 = vmul.f32 %v765, 1.442695
        %v770 = vpow.pop %v769
        %v771 = vmul.f32 %v766, 1.442695
        %v772 = vpow.pop %v771
        %v773 = vmul.f32 %v767, 1.442695
        %v774 = vpow.pop %v773
        %v775 = vmul.f32 %v768, 1.442695
        %v776 = vpow.pop %v775
        %v777 = vsel %vm567, %v770, 0.0
        %778 = vadd.xlane.f32.xlu0 %v777
        %v779 = vpop.xlane.xlu0 %778
        %v780 = vsel %vm567, %v772, 0.0
        %781 = vadd.xlane.f32.xlu0 %v780
        %v782 = vpop.xlane.xlu0 %781
        %v783 = vsel %vm567, %v774, 0.0
        %784 = vadd.xlane.f32.xlu0 %v783
        %v785 = vpop.xlane.xlu0 %784
        %v786 = vsel %vm567, %v776, 0.0
        %787 = vadd.xlane.f32.xlu0 %v786
        %v788 = vpop.xlane.xlu0 %787
        %v789 = vrcp.pop %v779
        %v790 = vrcp.pop %v782
        %v791 = vrcp.pop %v785
        %v792 = vrcp.pop %v788
        %v793 = vmul.f32 %v770, %v789
        %v794 = vmul.f32 %v772, %v790
        %v795 = vmul.f32 %v774, %v791
        %v796 = vmul.f32 %v776, %v792
        %797 = vst.msk [vmem:[%s331] sm:$0xff] %vm567, %v793
        %798 = vst.msk [vmem:[%s331 + $0x8] sm:$0xff] %vm567, %v794
        %799 = vst.msk [vmem:[%s331 + $0x10] sm:$0xff] %vm567, %v795
        %800 = vst.msk [vmem:[%s331 + $0x18] sm:$0xff] %vm567, %v796
        %v801 = vpack.c.bf16 %v793, %v793
        %v802 = vpack.c.bf16 %v794, %v794
        %v803 = vpack.c.bf16 %v795, %v795
        %v804 = vpack.c.bf16 %v796, %v796
        %v805 = vld [vmem:[#allocation4] sm:$0xf]
        %v806 = vld [vmem:[#allocation4 + $0x4] sm:$0xf]
        %v807 = vld [vmem:[#allocation4 + $0x8] sm:$0xf]
        %v808 = vld [vmem:[#allocation4 + $0xc] sm:$0xf]
        %v810 = vsel %vm567, %v801, 0
        %v813 = vsel %vm571, %v805, 0
        %815 = vmatprep.subr.bf16.mxu0 0
        %816 = vmatpush1.bf16.msra.mxu0 %v813
        %817 = vmatprep.subr.bf16.mxu0 0
        %818 = vmatpush1.bf16.msra.mxu0 0
        %819 = vmatprep.subr.bf16.mxu0 0
        %820 = vmatpush1.bf16.msra.mxu0 0
        %821 = vmatprep.subr.bf16.mxu0 0
        %822 = vmatpush1.bf16.msra.mxu0 0
        %823 = vmatprep.subr.bf16.mxu0 0
        %824 = vmatpush1.bf16.msra.mxu0 0
        %825 = vmatprep.subr.bf16.mxu0 0
        %826 = vmatpush1.bf16.msra.mxu0 0
        %827 = vmatprep.subr.bf16.mxu0 0
        %828 = vmatpush1.bf16.msra.mxu0 0
        %829 = vmatprep.subr.bf16.mxu0 0
        %830 = vmatpush1.bf16.msra.mxu0 0
        %831 = vmatprep.subr.bf16.mxu0 0
        %832 = vmatpush1.bf16.msra.mxu0 0
        %833 = vmatprep.subr.bf16.mxu0 0
        %834 = vmatpush1.bf16.msra.mxu0 0
        %835 = vmatprep.subr.bf16.mxu0 0
        %836 = vmatpush1.bf16.msra.mxu0 0
        %837 = vmatprep.subr.bf16.mxu0 0
        %838 = vmatpush1.bf16.msra.mxu0 0
        %839 = vmatprep.subr.bf16.mxu0 0
        %840 = vmatpush1.bf16.msra.mxu0 0
        %841 = vmatprep.subr.bf16.mxu0 0
        %842 = vmatpush1.bf16.msra.mxu0 0
        %843 = vmatprep.subr.bf16.mxu0 0
        %844 = vmatpush1.bf16.msra.mxu0 0
        %845 = vmatprep.subr.bf16.mxu0 0
        %846 = vmatpush1.bf16.msra.mxu0 0
        %847 = vmatprep.mubr.bf16.mxu0 0
        %848 = vmatmul.mubr.bf16.gmra.mrb[0].mxu0 %v810
        %v849 = vpop.f32.mrb[0].mxu0
        %v850 = vadd.f32 0.0, %v849
        %v851 = vpop.f32.mrb[0].mxu0
        %v852 = vpop.f32.mrb[0].mxu0
        %v853 = vpop.f32.mrb[0].mxu0
        %854 = vdwg.mxu0
        %v856 = vsel %vm567, %v802, 0
        %v859 = vsel %vm571, %v806, 0
        %861 = vmatprep.subr.bf16.mxu0 0
        %862 = vmatpush1.bf16.msra.mxu0 %v859
        %863 = vmatprep.subr.bf16.mxu0 0
        %864 = vmatpush1.bf16.msra.mxu0 0
        %865 = vmatprep.subr.bf16.mxu0 0
        %866 = vmatpush1.bf16.msra.mxu0 0
        %867 = vmatprep.subr.bf16.mxu0 0
        %868 = vmatpush1.bf16.msra.mxu0 0
        %869 = vmatprep.subr.bf16.mxu0 0
        %870 = vmatpush1.bf16.msra.mxu0 0
        %871 = vmatprep.subr.bf16.mxu0 0
        %872 = vmatpush1.bf16.msra.mxu0 0
        %873 = vmatprep.subr.bf16.mxu0 0
        %874 = vmatpush1.bf16.msra.mxu0 0
        %875 = vmatprep.subr.bf16.mxu0 0
        %876 = vmatpush1.bf16.msra.mxu0 0
        %877 = vmatprep.subr.bf16.mxu0 0
        %878 = vmatpush1.bf16.msra.mxu0 0
        %879 = vmatprep.subr.bf16.mxu0 0
        %880 = vmatpush1.bf16.msra.mxu0 0
        %881 = vmatprep.subr.bf16.mxu0 0
        %882 = vmatpush1.bf16.msra.mxu0 0
        %883 = vmatprep.subr.bf16.mxu0 0
        %884 = vmatpush1.bf16.msra.mxu0 0
        %885 = vmatprep.subr.bf16.mxu0 0
        %886 = vmatpush1.bf16.msra.mxu0 0
        %887 = vmatprep.subr.bf16.mxu0 0
        %888 = vmatpush1.bf16.msra.mxu0 0
        %889 = vmatprep.subr.bf16.mxu0 0
        %890 = vmatpush1.bf16.msra.mxu0 0
        %891 = vmatprep.subr.bf16.mxu0 0
        %892 = vmatpush1.bf16.msra.mxu0 0
        %893 = vmatprep.mubr.bf16.mxu0 0
        %894 = vmatmul.mubr.bf16.gmra.mrb[0].mxu0 %v856
        %v895 = vpop.f32.mrb[0].mxu0
        %v896 = vadd.f32 0.0, %v895
        %v897 = vpop.f32.mrb[0].mxu0
        %v898 = vpop.f32.mrb[0].mxu0
        %v899 = vpop.f32.mrb[0].mxu0
        %900 = vdwg.mxu0
        %v902 = vsel %vm567, %v803, 0
        %v905 = vsel %vm571, %v807, 0
        %907 = vmatprep.subr.bf16.mxu0 0
        %908 = vmatpush1.bf16.msra.mxu0 %v905
        %909 = vmatprep.subr.bf16.mxu0 0
        %910 = vmatpush1.bf16.msra.mxu0 0
        %911 = vmatprep.subr.bf16.mxu0 0
        %912 = vmatpush1.bf16.msra.mxu0 0
        %913 = vmatprep.subr.bf16.mxu0 0
        %914 = vmatpush1.bf16.msra.mxu0 0
        %915 = vmatprep.subr.bf16.mxu0 0
        %916 = vmatpush1.bf16.msra.mxu0 0
        %917 = vmatprep.subr.bf16.mxu0 0
        %918 = vmatpush1.bf16.msra.mxu0 0
        %919 = vmatprep.subr.bf16.mxu0 0
        %920 = vmatpush1.bf16.msra.mxu0 0
        %921 = vmatprep.subr.bf16.mxu0 0
        %922 = vmatpush1.bf16.msra.mxu0 0
        %923 = vmatprep.subr.bf16.mxu0 0
        %924 = vmatpush1.bf16.msra.mxu0 0
        %925 = vmatprep.subr.bf16.mxu0 0
        %926 = vmatpush1.bf16.msra.mxu0 0
        %927 = vmatprep.subr.bf16.mxu0 0
        %928 = vmatpush1.bf16.msra.mxu0 0
        %929 = vmatprep.subr.bf16.mxu0 0
        %930 = vmatpush1.bf16.msra.mxu0 0
        %931 = vmatprep.subr.bf16.mxu0 0
        %932 = vmatpush1.bf16.msra.mxu0 0
        %933 = vmatprep.subr.bf16.mxu0 0
        %934 = vmatpush1.bf16.msra.mxu0 0
        %935 = vmatprep.subr.bf16.mxu0 0
        %936 = vmatpush1.bf16.msra.mxu0 0
        %937 = vmatprep.subr.bf16.mxu0 0
        %938 = vmatpush1.bf16.msra.mxu0 0
        %939 = vmatprep.mubr.bf16.mxu0 0
        %940 = vmatmul.mubr.bf16.gmra.mrb[0].mxu0 %v902
        %v941 = vpop.f32.mrb[0].mxu0
        %v942 = vadd.f32 0.0, %v941
        %v943 = vpop.f32.mrb[0].mxu0
        %v944 = vpop.f32.mrb[0].mxu0
        %v945 = vpop.f32.mrb[0].mxu0
        %946 = vdwg.mxu0
        %v948 = vsel %vm567, %v804, 0
        %v951 = vsel %vm571, %v808, 0
        %953 = vmatprep.subr.bf16.mxu0 0
        %954 = vmatpush1.bf16.msra.mxu0 %v951
        %955 = vmatprep.subr.bf16.mxu0 0
        %956 = vmatpush1.bf16.msra.mxu0 0
        %957 = vmatprep.subr.bf16.mxu0 0
        %958 = vmatpush1.bf16.msra.mxu0 0
        %959 = vmatprep.subr.bf16.mxu0 0
        %960 = vmatpush1.bf16.msra.mxu0 0
        %961 = vmatprep.subr.bf16.mxu0 0
        %962 = vmatpush1.bf16.msra.mxu0 0
        %963 = vmatprep.subr.bf16.mxu0 0
        %964 = vmatpush1.bf16.msra.mxu0 0
        %965 = vmatprep.subr.bf16.mxu0 0
        %966 = vmatpush1.bf16.msra.mxu0 0
        %967 = vmatprep.subr.bf16.mxu0 0
        %968 = vmatpush1.bf16.msra.mxu0 0
        %969 = vmatprep.subr.bf16.mxu0 0
        %970 = vmatpush1.bf16.msra.mxu0 0
        %971 = vmatprep.subr.bf16.mxu0 0
        %972 = vmatpush1.bf16.msra.mxu0 0
        %973 = vmatprep.subr.bf16.mxu0 0
        %974 = vmatpush1.bf16.msra.mxu0 0
        %975 = vmatprep.subr.bf16.mxu0 0
        %976 = vmatpush1.bf16.msra.mxu0 0
        %977 = vmatprep.subr.bf16.mxu0 0
        %978 = vmatpush1.bf16.msra.mxu0 0
        %979 = vmatprep.subr.bf16.mxu0 0
        %980 = vmatpush1.bf16.msra.mxu0 0
        %981 = vmatprep.subr.bf16.mxu0 0
        %982 = vmatpush1.bf16.msra.mxu0 0
        %983 = vmatprep.subr.bf16.mxu0 0
        %984 = vmatpush1.bf16.msra.mxu0 0
        %985 = vmatprep.mubr.bf16.mxu0 0
        %986 = vmatmul.mubr.bf16.gmra.mrb[0].mxu0 %v948
        %v987 = vpop.f32.mrb[0].mxu0
        %v988 = vadd.f32 0.0, %v987
        %v989 = vpop.f32.mrb[0].mxu0
        %v990 = vpop.f32.mrb[0].mxu0
        %v991 = vpop.f32.mrb[0].mxu0
        %992 = vdwg.mxu0
        %993 = vst.msk [vmem:[%s324] sm:$0xff] %vm567, %v850
        %995 = vrot.lane.b32.xlu0 %v896, 8
        %v996 = vpop.permute.xlu0 %995
        %vm998 = vcmask 130112
        %999 = vst.msk [vmem:[%s324] sm:$0xff] %vm998, %v996
        %1001 = vrot.lane.b32.xlu0 %v942, 16
        %v1002 = vpop.permute.xlu0 %1001
        %vm1004 = vcmask 195712
        %1005 = vst.msk [vmem:[%s324] sm:$0xff] %vm1004, %v1002
        %1007 = vrot.lane.b32.xlu0 %v988, 24
        %v1008 = vpop.permute.xlu0 %1007
        %vm1010 = vcmask 261312
        %1011 = vst.msk [vmem:[%s324] sm:$0xff] %vm1010, %v1008
        %s1012 = sand.u32 %s186, 1
        %s1013 = scalar_lea.sflag [#allocation7], %s1012
        %s1014 = sand.u32 %s186, 1
        %s1015 = smul.addr %s1014, 8
        %s1016 = scalar_lea.vmem [#allocation8], %s1015
        %s1017 = sand.u32 %s214, 1
        %s1018 = scalar_lea.sflag [#allocation10], %s1017
        %s1019 = sand.u32 %s214, 1
        %s1020 = smul.addr %s1019, 32
        %s1021 = scalar_lea.vmem [#allocation9], %s1020
        // Predicated region
        $region53: #{tpu_custom_call.1} parent=43 // pred_check
          %p1022 = pneg %p196
        $region54: #{tpu_custom_call.1} parent=43 // pred_check_branch
          %1024 = sbr.rel (%p1022) target = $region56
        $region55: #{tpu_custom_call.1} parent=43 // pred_region
          %s1026 = ssub.s32 128, 128
          %1027 = vsyncadd %s1013, %s1026
          %s1028 = sadd.s32 %s33, %s32
          %s1029 = smul.addr %s1028, 128
          %s1030 = scalar_lea.hbm %s6, %s1029
          %s1032 = sshll.u32 %s1016, 4
          %s1033 = int_to_ptr.vmem [resolvable:$true] %s1032
          %1035 = dma.vmem_to_hbm [thread:$0]  %s1033, 128, %s1030, %s1013
        $region56: #{tpu_custom_call.1} parent=43 // pred_fallthru
          _
        // Predicated region
        $region57: #{tpu_custom_call.1} parent=43 // pred_check
          %p1036 = pneg %p224
        $region58: #{tpu_custom_call.1} parent=43 // pred_check_branch
          %1038 = sbr.rel (%p1036) target = $region60
        $region59: #{tpu_custom_call.1} parent=43 // pred_region
          %s1040 = ssub.s32 512, 512
          %1041 = vsyncadd %s1018, %s1040
          %s1042 = smul.addr %s32, 4
          %s1043 = sadd.s32 %s33, %s1042
          %s1044 = smul.addr %s1043, 128
          %s1045 = scalar_lea.hbm %s7, %s1044
          %s1046 = sshll.u32 %s1021, 4
          %s1047 = int_to_ptr.vmem [resolvable:$true] %s1046
          %1052 = dma.vmem_to_hbm [thread:$0]  %s1047, 512, %s1045, %s1018, 128, 128, 8
        $region60: #{tpu_custom_call.1} parent=43 // pred_fallthru
          _
      $region44: #{tpu_custom_call.1} parent=5 // pred_fallthru
        _
      %p1053 = scmp.le.s32.totalorder 2, %s23
      // Predicated region
      $region61: #{tpu_custom_call.1} parent=5 // pred_check
        %p1054 = pneg %p1053
      $region62: #{tpu_custom_call.1} parent=5 // pred_check_branch
        %1056 = sbr.rel (%p1054) target = $region64
      $region63: #{tpu_custom_call.1} parent=5 // pred_region
        %s1057 = ssub.s32 %s23, 2
        // Predicated region
        $region65: #{tpu_custom_call.1} parent=63 // pred_check
          %p1058 = pneg %p202
        $region66: #{tpu_custom_call.1} parent=63 // pred_check_branch
          %1060 = sbr.rel (%p1058) target = $region68
        $region67: #{tpu_custom_call.1} parent=63 // pred_region
          %s1061 = sand.u32 %s187, 1
          %s1062 = scalar_lea.sflag [#allocation7], %s1061
          %s1063 = sand.u32 %s187, 1
          %s1064 = smul.addr %s1063, 8
          %s1065 = scalar_lea.vmem [#allocation8], %s1064
          %1066 = dma.done %s1062, 128
        $region68: #{tpu_custom_call.1} parent=63 // pred_fallthru
          _
        // Predicated region
        $region69: #{tpu_custom_call.1} parent=63 // pred_check
          %p1067 = pneg %p230
        $region70: #{tpu_custom_call.1} parent=63 // pred_check_branch
          %1069 = sbr.rel (%p1067) target = $region72
        $region71: #{tpu_custom_call.1} parent=63 // pred_region
          %s1070 = sand.u32 %s215, 1
          %s1071 = scalar_lea.sflag [#allocation10], %s1070
          %s1072 = sand.u32 %s215, 1
          %s1073 = smul.addr %s1072, 32
          %s1074 = scalar_lea.vmem [#allocation9], %s1073
          %1075 = dma.done %s1071, 512
        $region72: #{tpu_custom_call.1} parent=63 // pred_fallthru
          _
      $region64: #{tpu_custom_call.1} parent=5 // pred_fallthru
        _
    $region6: #{tpu_custom_call.1} parent=1 // loop_footer
      %s27 = sadd.s32 1, %s23
    $region7: #{tpu_custom_call.1} parent=1 // loop_footer_branch
      %22 = sbr.rel target = $region3
    $region8: #{tpu_custom_call.1} parent=1 // loop_exit
      _
    %1076 = vsyncpa [#allocation6], 1
    %s1077 = scalar_lea.sflag [#allocation6], 1
    %1078 = vsyncpa %s1077, 1
    %1079 = vsyncpa [#allocation7], 1
    %s1080 = scalar_lea.sflag [#allocation7], 1
    %1081 = vsyncpa %s1080, 1
    %1082 = vsyncpa [#allocation10], 1
    %s1083 = scalar_lea.sflag [#allocation10], 1
    %1084 = vsyncpa %s1083, 1

</llo_original>
